<compile_context>
chip_gen: v5e
topology: v5e:2x2
jax: 0.10.0
libtpu: 0.0.40
codegen_flags: <defaults>
</compile_context>

<pallas_src>
import jax
import jax.numpy as jnp
from jax import lax
from jax.experimental import pallas as pl
from jax.experimental.pallas import tpu as pltpu

DIM = 300          # logical feature width of the PyTorch module
PDIM = 384         # padded width: 3 * 128 lanes, multiple of 8 sublanes
N_LAYERS = 6


def _round_up(n, m):
    return ((n + m - 1) // m) * m


def relu_linear_kernel(x_ref, w_ref, b_ref, o_ref):
    # x_ref: (TILE_B, PDIM) bf16      w_ref: (6, PDIM, PDIM) bf16, (in, out) layout
    # b_ref: (6, PDIM) f32            o_ref: (TILE_B, PDIM) bf16
    h = x_ref[...]                                       # bf16
    for i in range(N_LAYERS):                            # static unroll: 6 MXU matmuls
        z = lax.dot_general(
            h,                                           # bf16 (M, K)
            w_ref[i],                                    # bf16 (K, N): standard contraction
            dimension_numbers=(((1,), (0,)), ((), ())),
            preferred_element_type=jnp.float32,          # f32 accumulation
        )
        z = z + b_ref[i][None, :]                        # bias-add in f32 (VPU)
        h = jnp.maximum(z, 0.0).astype(jnp.bfloat16)     # ReLU in f32, store bf16
    o_ref[...] = h


def init_params(key):
    """PyTorch-style init: U(-1/sqrt(fan_in), 1/sqrt(fan_in)); (out, in) weight layout."""
    bound = 1.0 / (DIM ** 0.5)
    kw, kb = jax.random.split(key)
    weights = jax.random.uniform(
        kw, (N_LAYERS, DIM, DIM), minval=-bound, maxval=bound, dtype=jnp.float32
    )
    biases = jax.random.uniform(
        kb, (N_LAYERS, DIM), minval=-bound, maxval=bound, dtype=jnp.float32
    )
    return weights, biases


def prepare_params(weights, biases):
    """One-time: transpose to (in, out), zero-pad 300 -> 384, quantize weights to bf16."""
    w_kn = jnp.transpose(weights, (0, 2, 1))             # (layer, in, out) = (K, N)
    w_pad = jnp.zeros((N_LAYERS, PDIM, PDIM), jnp.float32)
    w_pad = w_pad.at[:, :DIM, :DIM].set(w_kn).astype(jnp.bfloat16)
    b_pad = jnp.zeros((N_LAYERS, PDIM), jnp.float32).at[:, :DIM].set(biases)
    return w_pad, b_pad


def _choose_tiling(B, max_tile_b):
    """Pick a row tile: multiple of 8, <= max_tile_b, minimal padding, >=2 grid steps
    when there are >= 16 rows so both v7x TensorCores get work."""
    B8 = _round_up(max(B, 1), 8)
    min_tiles = 2 if B8 >= 16 else 1
    n_tiles = max(min_tiles, pl.cdiv(B8, max_tile_b))
    tb = _round_up(pl.cdiv(B8, n_tiles), 8)
    b_pad = _round_up(B8, tb)
    return tb, b_pad


def relu_linear(x, w_pad_bf16, b_pad, *, tile_b=1024):
    """x: (B, 300) f32/bf16; w_pad_bf16: (6, 384, 384) bf16 (in,out); b_pad: (6, 384) f32.

    Returns (B, 300) bf16 (bf16 activations are an accepted accuracy trade-off)."""
    B = x.shape[0]
    tb, B_pad = _choose_tiling(B, tile_b)
    x_pad = jnp.zeros((B_pad, PDIM), jnp.bfloat16).at[:B, :DIM].set(
        x.astype(jnp.bfloat16)
    )

    cost = pl.CostEstimate(
        flops=2 * B_pad * PDIM * PDIM * N_LAYERS,
        transcendentals=0,
        bytes_accessed=(w_pad_bf16.size * 2 + b_pad.size * 4
                        + x_pad.size * 2 + B_pad * PDIM * 2),
    )

    out = pl.pallas_call(
        relu_linear_kernel,
        out_shape=jax.ShapeDtypeStruct((B_pad, PDIM), jnp.bfloat16),
        grid_spec=pltpu.PrefetchScalarGridSpec(
            num_scalar_prefetch=0,
            grid=(B_pad // tb,),
            in_specs=[
                pl.BlockSpec((tb, PDIM), lambda i: (i, 0)),                 # x tile
                pl.BlockSpec((N_LAYERS, PDIM, PDIM), lambda i: (0, 0, 0)),  # weights resident
                pl.BlockSpec((N_LAYERS, PDIM), lambda i: (0, 0)),           # biases resident
            ],
            out_specs=pl.BlockSpec((tb, PDIM), lambda i: (i, 0)),
        ),
        compiler_params=pltpu.CompilerParams(
            dimension_semantics=("parallel",),
            vmem_limit_bytes=32 * 1024 * 1024,   # uniform, safe budget on v5e/v6e/v7x
        ),
        cost_estimate=cost,
    )(x_pad, w_pad_bf16, b_pad)

    return out[:B, :DIM]


def relu_linear_ref(x, weights, biases):
    """Pure-JAX f32 reference of the PyTorch forward (y = relu(x @ W.T + b), 6x)."""
    h = x
    for i in range(N_LAYERS):
        h = jnp.maximum(h @ weights[i].T + biases[i], 0.0)
    return h


if __name__ == "__main__":
    key = jax.random.PRNGKey(0)
    kx, kp = jax.random.split(key)

    B = 8
    x = jax.random.normal(kx, (B, DIM), dtype=jnp.float32)
    weights, biases = init_params(kp)
    w_pad_bf16, b_pad = prepare_params(weights, biases)

    out = relu_linear(x, w_pad_bf16, b_pad)
    out = jax.block_until_ready(out)

    ref = relu_linear_ref(x, weights, biases)
    assert out.shape == (B, DIM)
    # Tolerance loosened because weights AND activations are bf16 (accumulation f32).
    assert jnp.allclose(out.astype(jnp.float32), ref, atol=5e-2, rtol=5e-2), \
        "Pallas kernel mismatch vs reference"

    print("KERNEL_OK")
</pallas_src>

<mosaic_0001>
module attributes {stable_mosaic.version = 11 : i64} {
  func.func @relu_linear_kernel(%arg0: i32, %arg1: memref<8x384xbf16, #tpu.memory_space<vmem>>, %arg2: memref<6x384x384xbf16, #tpu.memory_space<vmem>>, %arg3: memref<6x384xf32, #tpu.memory_space<vmem>>, %arg4: memref<8x384xbf16, #tpu.memory_space<vmem>>) attributes {dimension_semantics = [#tpu.dimension_semantics<parallel>], iteration_bounds = array<i64: 1>, scalar_prefetch = 0 : i64, scratch_operands = 0 : i64, tpu.core_type = #tpu.core_type<tc>, window_params = [{transform_indices = @transform_0, window_bounds = array<i64: 8, 384>}, {pipeline_mode = #tpu.pipeline_mode<synchronous>, transform_indices = @transform_1, window_bounds = array<i64: 6, 384, 384>}, {pipeline_mode = #tpu.pipeline_mode<synchronous>, transform_indices = @transform_2, window_bounds = array<i64: 6, 384>}, {transform_indices = @transform_3, window_bounds = array<i64: 8, 384>}]} {
    %c0 = arith.constant 0 : index
    %c0_0 = arith.constant 0 : index
    %0 = vector.load %arg1[%c0, %c0_0] : memref<8x384xbf16, #tpu.memory_space<vmem>>, vector<8x384xbf16>
    %c0_1 = arith.constant 0 : index
    %c0_2 = arith.constant 0 : index
    %c0_3 = arith.constant 0 : index
    %1 = vector.load %arg2[%c0_1, %c0_2, %c0_3] : memref<6x384x384xbf16, #tpu.memory_space<vmem>>, vector<1x384x384xbf16>
    %2 = vector.shape_cast %1 : vector<1x384x384xbf16> to vector<384x384xbf16>
    %cst = arith.constant dense<0.000000e+00> : vector<8x384xf32>
    %3 = tpu.matmul %0, %2, %cst {dimension_numbers = #tpu.dot_dimension_numbers<[1], [0], [0], [1], [0, 0, 1, 1], [], []>} : vector<8x384xbf16>, vector<384x384xbf16>, vector<8x384xf32> -> vector<8x384xf32>
    %c0_4 = arith.constant 0 : index
    %c0_5 = arith.constant 0 : index
    %4 = vector.load %arg3[%c0_4, %c0_5] : memref<6x384xf32, #tpu.memory_space<vmem>>, vector<1x384xf32>
    %5 = vector.shape_cast %4 : vector<1x384xf32> to vector<384xf32>
    %6 = vector.shape_cast %5 : vector<384xf32> to vector<1x384xf32>
    %7 = vector.broadcast %6 : vector<1x384xf32> to vector<8x384xf32>
    %8 = arith.addf %3, %7 : vector<8x384xf32>
    %cst_6 = arith.constant 0.000000e+00 : f32
    %9 = vector.broadcast %cst_6 : f32 to vector<8x384xf32>
    %10 = arith.maximumf %8, %9 : vector<8x384xf32>
    %11 = arith.truncf %10 : vector<8x384xf32> to vector<8x384xbf16>
    %c1 = arith.constant 1 : index
    %c0_7 = arith.constant 0 : index
    %c0_8 = arith.constant 0 : index
    %12 = vector.load %arg2[%c1, %c0_7, %c0_8] : memref<6x384x384xbf16, #tpu.memory_space<vmem>>, vector<1x384x384xbf16>
    %13 = vector.shape_cast %12 : vector<1x384x384xbf16> to vector<384x384xbf16>
    %cst_9 = arith.constant dense<0.000000e+00> : vector<8x384xf32>
    %14 = tpu.matmul %11, %13, %cst_9 {dimension_numbers = #tpu.dot_dimension_numbers<[1], [0], [0], [1], [0, 0, 1, 1], [], []>} : vector<8x384xbf16>, vector<384x384xbf16>, vector<8x384xf32> -> vector<8x384xf32>
    %c1_10 = arith.constant 1 : index
    %c0_11 = arith.constant 0 : index
    %15 = vector.load %arg3[%c1_10, %c0_11] : memref<6x384xf32, #tpu.memory_space<vmem>>, vector<1x384xf32>
    %16 = vector.shape_cast %15 : vector<1x384xf32> to vector<384xf32>
    %17 = vector.shape_cast %16 : vector<384xf32> to vector<1x384xf32>
    %18 = vector.broadcast %17 : vector<1x384xf32> to vector<8x384xf32>
    %19 = arith.addf %14, %18 : vector<8x384xf32>
    %cst_12 = arith.constant 0.000000e+00 : f32
    %20 = vector.broadcast %cst_12 : f32 to vector<8x384xf32>
    %21 = arith.maximumf %19, %20 : vector<8x384xf32>
    %22 = arith.truncf %21 : vector<8x384xf32> to vector<8x384xbf16>
    %c2 = arith.constant 2 : index
    %c0_13 = arith.constant 0 : index
    %c0_14 = arith.constant 0 : index
    %23 = vector.load %arg2[%c2, %c0_13, %c0_14] : memref<6x384x384xbf16, #tpu.memory_space<vmem>>, vector<1x384x384xbf16>
    %24 = vector.shape_cast %23 : vector<1x384x384xbf16> to vector<384x384xbf16>
    %cst_15 = arith.constant dense<0.000000e+00> : vector<8x384xf32>
    %25 = tpu.matmul %22, %24, %cst_15 {dimension_numbers = #tpu.dot_dimension_numbers<[1], [0], [0], [1], [0, 0, 1, 1], [], []>} : vector<8x384xbf16>, vector<384x384xbf16>, vector<8x384xf32> -> vector<8x384xf32>
    %c2_16 = arith.constant 2 : index
    %c0_17 = arith.constant 0 : index
    %26 = vector.load %arg3[%c2_16, %c0_17] : memref<6x384xf32, #tpu.memory_space<vmem>>, vector<1x384xf32>
    %27 = vector.shape_cast %26 : vector<1x384xf32> to vector<384xf32>
    %28 = vector.shape_cast %27 : vector<384xf32> to vector<1x384xf32>
    %29 = vector.broadcast %28 : vector<1x384xf32> to vector<8x384xf32>
    %30 = arith.addf %25, %29 : vector<8x384xf32>
    %cst_18 = arith.constant 0.000000e+00 : f32
    %31 = vector.broadcast %cst_18 : f32 to vector<8x384xf32>
    %32 = arith.maximumf %30, %31 : vector<8x384xf32>
    %33 = arith.truncf %32 : vector<8x384xf32> to vector<8x384xbf16>
    %c3 = arith.constant 3 : index
    %c0_19 = arith.constant 0 : index
    %c0_20 = arith.constant 0 : index
    %34 = vector.load %arg2[%c3, %c0_19, %c0_20] : memref<6x384x384xbf16, #tpu.memory_space<vmem>>, vector<1x384x384xbf16>
    %35 = vector.shape_cast %34 : vector<1x384x384xbf16> to vector<384x384xbf16>
    %cst_21 = arith.constant dense<0.000000e+00> : vector<8x384xf32>
    %36 = tpu.matmul %33, %35, %cst_21 {dimension_numbers = #tpu.dot_dimension_numbers<[1], [0], [0], [1], [0, 0, 1, 1], [], []>} : vector<8x384xbf16>, vector<384x384xbf16>, vector<8x384xf32> -> vector<8x384xf32>
    %c3_22 = arith.constant 3 : index
    %c0_23 = arith.constant 0 : index
    %37 = vector.load %arg3[%c3_22, %c0_23] : memref<6x384xf32, #tpu.memory_space<vmem>>, vector<1x384xf32>
    %38 = vector.shape_cast %37 : vector<1x384xf32> to vector<384xf32>
    %39 = vector.shape_cast %38 : vector<384xf32> to vector<1x384xf32>
    %40 = vector.broadcast %39 : vector<1x384xf32> to vector<8x384xf32>
    %41 = arith.addf %36, %40 : vector<8x384xf32>
    %cst_24 = arith.constant 0.000000e+00 : f32
    %42 = vector.broadcast %cst_24 : f32 to vector<8x384xf32>
    %43 = arith.maximumf %41, %42 : vector<8x384xf32>
    %44 = arith.truncf %43 : vector<8x384xf32> to vector<8x384xbf16>
    %c4 = arith.constant 4 : index
    %c0_25 = arith.constant 0 : index
    %c0_26 = arith.constant 0 : index
    %45 = vector.load %arg2[%c4, %c0_25, %c0_26] : memref<6x384x384xbf16, #tpu.memory_space<vmem>>, vector<1x384x384xbf16>
    %46 = vector.shape_cast %45 : vector<1x384x384xbf16> to vector<384x384xbf16>
    %cst_27 = arith.constant dense<0.000000e+00> : vector<8x384xf32>
    %47 = tpu.matmul %44, %46, %cst_27 {dimension_numbers = #tpu.dot_dimension_numbers<[1], [0], [0], [1], [0, 0, 1, 1], [], []>} : vector<8x384xbf16>, vector<384x384xbf16>, vector<8x384xf32> -> vector<8x384xf32>
    %c4_28 = arith.constant 4 : index
    %c0_29 = arith.constant 0 : index
    %48 = vector.load %arg3[%c4_28, %c0_29] : memref<6x384xf32, #tpu.memory_space<vmem>>, vector<1x384xf32>
    %49 = vector.shape_cast %48 : vector<1x384xf32> to vector<384xf32>
    %50 = vector.shape_cast %49 : vector<384xf32> to vector<1x384xf32>
    %51 = vector.broadcast %50 : vector<1x384xf32> to vector<8x384xf32>
    %52 = arith.addf %47, %51 : vector<8x384xf32>
    %cst_30 = arith.constant 0.000000e+00 : f32
    %53 = vector.broadcast %cst_30 : f32 to vector<8x384xf32>
    %54 = arith.maximumf %52, %53 : vector<8x384xf32>
    %55 = arith.truncf %54 : vector<8x384xf32> to vector<8x384xbf16>
    %c5 = arith.constant 5 : index
    %c0_31 = arith.constant 0 : index
    %c0_32 = arith.constant 0 : index
    %56 = vector.load %arg2[%c5, %c0_31, %c0_32] : memref<6x384x384xbf16, #tpu.memory_space<vmem>>, vector<1x384x384xbf16>
    %57 = vector.shape_cast %56 : vector<1x384x384xbf16> to vector<384x384xbf16>
    %cst_33 = arith.constant dense<0.000000e+00> : vector<8x384xf32>
    %58 = tpu.matmul %55, %57, %cst_33 {dimension_numbers = #tpu.dot_dimension_numbers<[1], [0], [0], [1], [0, 0, 1, 1], [], []>} : vector<8x384xbf16>, vector<384x384xbf16>, vector<8x384xf32> -> vector<8x384xf32>
    %c5_34 = arith.constant 5 : index
    %c0_35 = arith.constant 0 : index
    %59 = vector.load %arg3[%c5_34, %c0_35] : memref<6x384xf32, #tpu.memory_space<vmem>>, vector<1x384xf32>
    %60 = vector.shape_cast %59 : vector<1x384xf32> to vector<384xf32>
    %61 = vector.shape_cast %60 : vector<384xf32> to vector<1x384xf32>
    %62 = vector.broadcast %61 : vector<1x384xf32> to vector<8x384xf32>
    %63 = arith.addf %58, %62 : vector<8x384xf32>
    %cst_36 = arith.constant 0.000000e+00 : f32
    %64 = vector.broadcast %cst_36 : f32 to vector<8x384xf32>
    %65 = arith.maximumf %63, %64 : vector<8x384xf32>
    %66 = arith.truncf %65 : vector<8x384xf32> to vector<8x384xbf16>
    %c0_37 = arith.constant 0 : index
    %c0_38 = arith.constant 0 : index
    %67 = vector.load %arg4[%c0_37, %c0_38] : memref<8x384xbf16, #tpu.memory_space<vmem>>, vector<8x384xbf16>
    tpu.vector_store %arg4[%c0_37, %c0_38], %66 {strides = array<i32>} : memref<8x384xbf16, #tpu.memory_space<vmem>>, vector<8x384xbf16>,
    return
  }
  func.func @transform_0(%arg0: i32) -> (i32, i32) {
    %c0_i32 = arith.constant 0 : i32
    %c0_i32_0 = arith.constant 0 : i32
    return %arg0, %c0_i32 : i32, i32
  }
  func.func @transform_1(%arg0: i32) -> (i32, i32, i32) {
    %c0_i32 = arith.constant 0 : i32
    %c0_i32_0 = arith.constant 0 : i32
    %c0_i32_1 = arith.constant 0 : i32
    %c0_i32_2 = arith.constant 0 : i32
    return %c0_i32, %c0_i32_0, %c0_i32_1 : i32, i32, i32
  }
  func.func @transform_2(%arg0: i32) -> (i32, i32) {
    %c0_i32 = arith.constant 0 : i32
    %c0_i32_0 = arith.constant 0 : i32
    %c0_i32_1 = arith.constant 0 : i32
    return %c0_i32, %c0_i32_0 : i32, i32
  }
  func.func @transform_3(%arg0: i32) -> (i32, i32) {
    %c0_i32 = arith.constant 0 : i32
    %c0_i32_0 = arith.constant 0 : i32
    return %arg0, %c0_i32 : i32, i32
  }
}

</mosaic_0001>

<llo_original>
// kernel: tpu_custom_call.1
$region0: #{tpu_custom_call.1}
  #allocation0 [shape = 'u32[]', space=smem, size = 0x4, offset = 0x4, fixed_abs, tag = 'smem constant byte address 0x4 - core index']
  #allocation1 [shape = 'u32[72,128]{1,0:T(1,128)}', space=vmem, size = 0x9000, scoped, tag = 'internal scratch']
  %s0 = inlined_call_operand.hbm [shape: bf16[8,384], index: 0, kind: input, shape index: {}]
  %s1 = inlined_call_operand.hbm [shape: bf16[6,384,384], index: 1, kind: input, shape index: {}]
  %s2 = inlined_call_operand.hbm [shape: f32[6,384], index: 2, kind: input, shape index: {}]
  %s3 = inlined_call_operand.hbm [shape: bf16[8,384], index: 3, kind: output, shape index: {}]
  %s4 = sld [smem:[#allocation0]]
  $region34: #{tpu_custom_call.1} parent=0
    _
  %s6 = ssub.s32 1, %s4
  %s7 = scalar_select 0, %s6, %s4
  $region1: #{tpu_custom_call.1} parent=0
    #allocation2 [shape = 'u8[6144]{0}', space=vmem, size = 0x1800, scoped, tag = 'input window, operand 0, single buffered']
    #allocation3 [shape = 's32[1]{0}', space=sflag, size = 0x4, scoped, tag = 'scoped memory for tpu_custom_call.1']
    #allocation4 [shape = 's32[1]{0}', space=sflag, size = 0x4, scoped, tag = 'scoped memory for tpu_custom_call.1']
    #allocation5 [shape = 'u8[1769472]{0}', space=vmem, size = 0x1b0000, scoped, tag = 'input window, operand 1, single buffered']
    #allocation6 [shape = 's32[1]{0}', space=sflag, size = 0x4, scoped, tag = 'scoped memory for tpu_custom_call.1']
    #allocation7 [shape = 'u8[12288]{0}', space=vmem, size = 0x3000, scoped, tag = 'input window, operand 2, single buffered']
    #allocation8 [shape = 'u8[6144]{0}', space=vmem, size = 0x1800, scoped, tag = 'output window, operand 0, single buffered']
    %8 = vsyncpa [#allocation3], 0
    %9 = vsyncpa [#allocation6], 0
    %10 = vsyncpa [#allocation4], 0
    // Predicated region
    $region2: #{tpu_custom_call.1} parent=1 // pred_check
      _
    $region3: #{tpu_custom_call.1} parent=1 // pred_check_branch
      %12 = sbr.rel (0) target = $region5
    $region4: #{tpu_custom_call.1} parent=1 // pred_region
      %14 = vsyncadd [#allocation3], 0
      %s16 = sshll.u32 %s0, 4
      %s17 = int_to_ptr.hbm [resolvable:$true] %s16
      %s18 = sshll.u32 [#allocation2], 4
      %s19 = int_to_ptr.vmem [resolvable:$true] %s18
      %21 = dma.hbm_to_vmem [thread:$0]  %s17, 192, %s19, [#allocation3]
    $region5: #{tpu_custom_call.1} parent=1 // pred_fallthru
      _
    // Predicated region
    $region6: #{tpu_custom_call.1} parent=1 // pred_check
      _
    $region7: #{tpu_custom_call.1} parent=1 // pred_check_branch
      %23 = sbr.rel (0) target = $region9
    $region8: #{tpu_custom_call.1} parent=1 // pred_region
      %25 = vsyncadd [#allocation6], 0
      %s26 = sshll.u32 %s1, 4
      %s27 = int_to_ptr.hbm [resolvable:$true] %s26
      %s28 = sshll.u32 [#allocation5], 4
      %s29 = int_to_ptr.vmem [resolvable:$true] %s28
      %34 = dma.hbm_to_vmem [thread:$0]  %s27, 55296, %s29, [#allocation6], 192, 192, 12
    $region9: #{tpu_custom_call.1} parent=1 // pred_fallthru
      _
    // Predicated region
    $region10: #{tpu_custom_call.1} parent=1 // pred_check
      _
    $region11: #{tpu_custom_call.1} parent=1 // pred_check_branch
      %36 = sbr.rel (0) target = $region13
    $region12: #{tpu_custom_call.1} parent=1 // pred_region
      %38 = vsyncadd [#allocation6], 0
      %s40 = sshll.u32 %s2, 4
      %s41 = int_to_ptr.hbm [resolvable:$true] %s40
      %s42 = sshll.u32 [#allocation7], 4
      %s43 = int_to_ptr.vmem [resolvable:$true] %s42
      %45 = dma.hbm_to_vmem [thread:$0]  %s41, 384, %s43, [#allocation6]
    $region13: #{tpu_custom_call.1} parent=1 // pred_fallthru
      _
    // Predicated region
    $region14: #{tpu_custom_call.1} parent=1 // pred_check
      _
    $region15: #{tpu_custom_call.1} parent=1 // pred_check_branch
      %47 = sbr.rel (0) target = $region17
    $region16: #{tpu_custom_call.1} parent=1 // pred_region
      %49 = dma.done [#allocation3], 192
    $region17: #{tpu_custom_call.1} parent=1 // pred_fallthru
      _
    // Predicated region
    $region18: #{tpu_custom_call.1} parent=1 // pred_check
      _
    $region19: #{tpu_custom_call.1} parent=1 // pred_check_branch
      %51 = sbr.rel (0) target = $region21
    $region20: #{tpu_custom_call.1} parent=1 // pred_region
      %53 = dma.done [#allocation6], 55296
    $region21: #{tpu_custom_call.1} parent=1 // pred_fallthru
      _
    // Predicated region
    $region22: #{tpu_custom_call.1} parent=1 // pred_check
      _
    $region23: #{tpu_custom_call.1} parent=1 // pred_check_branch
      %55 = sbr.rel (0) target = $region25
    $region24: #{tpu_custom_call.1} parent=1 // pred_region
      %57 = dma.done [#allocation6], 384
    $region25: #{tpu_custom_call.1} parent=1 // pred_fallthru
      _
    %v58 = vld [vmem:[#allocation2] sm:$0xff]
    %v59 = vld [vmem:[#allocation2 + $0x8] sm:$0xf]
    %v60 = vld [vmem:[#allocation5] sm:$0xff]
    %v61 = vld [vmem:[#allocation5 + $0x8] sm:$0xf]
    %v62 = vld [vmem:[#allocation5 + $0xc] sm:$0xff]
    %v63 = vld [vmem:[#allocation5 + $0x14] sm:$0xf]
    %v64 = vld [vmem:[#allocation5 + $0x18] sm:$0xff]
    %v65 = vld [vmem:[#allocation5 + $0x20] sm:$0xf]
    %v66 = vld [vmem:[#allocation5 + $0x24] sm:$0xff]
    %v67 = vld [vmem:[#allocation5 + $0x2c] sm:$0xf]
    %v68 = vld [vmem:[#allocation5 + $0x30] sm:$0xff]
    %v69 = vld [vmem:[#allocation5 + $0x38] sm:$0xf]
    %v70 = vld [vmem:[#allocation5 + $0x3c] sm:$0xff]
    %v71 = vld [vmem:[#allocation5 + $0x44] sm:$0xf]
    %v72 = vld [vmem:[#allocation5 + $0x48] sm:$0xff]
    %v73 = vld [vmem:[#allocation5 + $0x50] sm:$0xf]
    %v74 = vld [vmem:[#allocation5 + $0x54] sm:$0xff]
    %v75 = vld [vmem:[#allocation5 + $0x5c] sm:$0xf]
    %v76 = vld [vmem:[#allocation5 + $0x60] sm:$0xff]
    %v77 = vld [vmem:[#allocation5 + $0x68] sm:$0xf]
    %v78 = vld [vmem:[#allocation5 + $0x6c] sm:$0xff]
    %v79 = vld [vmem:[#allocation5 + $0x74] sm:$0xf]
    %v80 = vld [vmem:[#allocation5 + $0x78] sm:$0xff]
    %v81 = vld [vmem:[#allocation5 + $0x80] sm:$0xf]
    %v82 = vld [vmem:[#allocation5 + $0x84] sm:$0xff]
    %v83 = vld [vmem:[#allocation5 + $0x8c] sm:$0xf]
    %v84 = vld [vmem:[#allocation5 + $0x90] sm:$0xff]
    %v85 = vld [vmem:[#allocation5 + $0x98] sm:$0xf]
    %v86 = vld [vmem:[#allocation5 + $0x9c] sm:$0xff]
    %v87 = vld [vmem:[#allocation5 + $0xa4] sm:$0xf]
    %v88 = vld [vmem:[#allocation5 + $0xa8] sm:$0xff]
    %v89 = vld [vmem:[#allocation5 + $0xb0] sm:$0xf]
    %v90 = vld [vmem:[#allocation5 + $0xb4] sm:$0xff]
    %v91 = vld [vmem:[#allocation5 + $0xbc] sm:$0xf]
    %v92 = vld [vmem:[#allocation5 + $0xc0] sm:$0xff]
    %v93 = vld [vmem:[#allocation5 + $0xc8] sm:$0xf]
    %v94 = vld [vmem:[#allocation5 + $0xcc] sm:$0xff]
    %v95 = vld [vmem:[#allocation5 + $0xd4] sm:$0xf]
    %v96 = vld [vmem:[#allocation5 + $0xd8] sm:$0xff]
    %v97 = vld [vmem:[#allocation5 + $0xe0] sm:$0xf]
    %v98 = vld [vmem:[#allocation5 + $0xe4] sm:$0xff]
    %v99 = vld [vmem:[#allocation5 + $0xec] sm:$0xf]
    %v100 = vld [vmem:[#allocation5 + $0xf0] sm:$0xff]
    %v101 = vld [vmem:[#allocation5 + $0xf8] sm:$0xf]
    %v102 = vld [vmem:[#allocation5 + $0xfc] sm:$0xff]
    %v103 = vld [vmem:[#allocation5 + $0x104] sm:$0xf]
    %v104 = vld [vmem:[#allocation5 + $0x108] sm:$0xff]
    %v105 = vld [vmem:[#allocation5 + $0x110] sm:$0xf]
    %v106 = vld [vmem:[#allocation5 + $0x114] sm:$0xff]
    %v107 = vld [vmem:[#allocation5 + $0x11c] sm:$0xf]
    %v108 = vld [vmem:[#allocation5 + $0x120] sm:$0xff]
    %v109 = vld [vmem:[#allocation5 + $0x128] sm:$0xf]
    %v110 = vld [vmem:[#allocation5 + $0x12c] sm:$0xff]
    %v111 = vld [vmem:[#allocation5 + $0x134] sm:$0xf]
    %v112 = vld [vmem:[#allocation5 + $0x138] sm:$0xff]
    %v113 = vld [vmem:[#allocation5 + $0x140] sm:$0xf]
    %v114 = vld [vmem:[#allocation5 + $0x144] sm:$0xff]
    %v115 = vld [vmem:[#allocation5 + $0x14c] sm:$0xf]
    %v116 = vld [vmem:[#allocation5 + $0x150] sm:$0xff]
    %v117 = vld [vmem:[#allocation5 + $0x158] sm:$0xf]
    %v118 = vld [vmem:[#allocation5 + $0x15c] sm:$0xff]
    %v119 = vld [vmem:[#allocation5 + $0x164] sm:$0xf]
    %v120 = vld [vmem:[#allocation5 + $0x168] sm:$0xff]
    %v121 = vld [vmem:[#allocation5 + $0x170] sm:$0xf]
    %v122 = vld [vmem:[#allocation5 + $0x174] sm:$0xff]
    %v123 = vld [vmem:[#allocation5 + $0x17c] sm:$0xf]
    %v124 = vld [vmem:[#allocation5 + $0x180] sm:$0xff]
    %v125 = vld [vmem:[#allocation5 + $0x188] sm:$0xf]
    %v126 = vld [vmem:[#allocation5 + $0x18c] sm:$0xff]
    %v127 = vld [vmem:[#allocation5 + $0x194] sm:$0xf]
    %v128 = vld [vmem:[#allocation5 + $0x198] sm:$0xff]
    %v129 = vld [vmem:[#allocation5 + $0x1a0] sm:$0xf]
    %v130 = vld [vmem:[#allocation5 + $0x1a4] sm:$0xff]
    %v131 = vld [vmem:[#allocation5 + $0x1ac] sm:$0xf]
    %v132 = vld [vmem:[#allocation5 + $0x1b0] sm:$0xff]
    %v133 = vld [vmem:[#allocation5 + $0x1b8] sm:$0xf]
    %v134 = vld [vmem:[#allocation5 + $0x1bc] sm:$0xff]
    %v135 = vld [vmem:[#allocation5 + $0x1c4] sm:$0xf]
    %v136 = vld [vmem:[#allocation5 + $0x1c8] sm:$0xff]
    %v137 = vld [vmem:[#allocation5 + $0x1d0] sm:$0xf]
    %v138 = vld [vmem:[#allocation5 + $0x1d4] sm:$0xff]
    %v139 = vld [vmem:[#allocation5 + $0x1dc] sm:$0xf]
    %v140 = vld [vmem:[#allocation5 + $0x1e0] sm:$0xff]
    %v141 = vld [vmem:[#allocation5 + $0x1e8] sm:$0xf]
    %v142 = vld [vmem:[#allocation5 + $0x1ec] sm:$0xff]
    %v143 = vld [vmem:[#allocation5 + $0x1f4] sm:$0xf]
    %v144 = vld [vmem:[#allocation5 + $0x1f8] sm:$0xff]
    %v145 = vld [vmem:[#allocation5 + $0x200] sm:$0xf]
    %v146 = vld [vmem:[#allocation5 + $0x204] sm:$0xff]
    %v147 = vld [vmem:[#allocation5 + $0x20c] sm:$0xf]
    %v148 = vld [vmem:[#allocation5 + $0x210] sm:$0xff]
    %v149 = vld [vmem:[#allocation5 + $0x218] sm:$0xf]
    %v150 = vld [vmem:[#allocation5 + $0x21c] sm:$0xff]
    %v151 = vld [vmem:[#allocation5 + $0x224] sm:$0xf]
    %v152 = vld [vmem:[#allocation5 + $0x228] sm:$0xff]
    %v153 = vld [vmem:[#allocation5 + $0x230] sm:$0xf]
    %v154 = vld [vmem:[#allocation5 + $0x234] sm:$0xff]
    %v155 = vld [vmem:[#allocation5 + $0x23c] sm:$0xf]
    %v156 = vld [vmem:[#allocation7] ss:$8 sm:$0x7]
    %v158 = vperm.slane %v156, 0
    %v159 = vperm.slane %v156, 1
    %v160 = vperm.slane %v156, 2
    %v166 = vunpack.c.l.b16 %v58
    %v167 = vunpack.c.h.b16 %v58
    %v168 = vunpack.c.l.b16 %v59
    %v169 = vpack.c.b16 %v166, %v166
    %v170 = vpack.c.b16 %v167, %v167
    %v171 = vpack.c.b16 %v168, %v168
    %v271 = vunpack.c.l.b16 %v60
    %v272 = vunpack.c.h.b16 %v60
    %v273 = vunpack.c.l.b16 %v61
    %v274 = vunpack.c.l.b16 %v62
    %v275 = vunpack.c.h.b16 %v62
    %v276 = vunpack.c.l.b16 %v63
    %v277 = vunpack.c.l.b16 %v64
    %v278 = vunpack.c.h.b16 %v64
    %v279 = vunpack.c.l.b16 %v65
    %v280 = vunpack.c.l.b16 %v66
    %v281 = vunpack.c.h.b16 %v66
    %v282 = vunpack.c.l.b16 %v67
    %v283 = vunpack.c.l.b16 %v68
    %v284 = vunpack.c.h.b16 %v68
    %v285 = vunpack.c.l.b16 %v69
    %v286 = vunpack.c.l.b16 %v70
    %v287 = vunpack.c.h.b16 %v70
    %v288 = vunpack.c.l.b16 %v71
    %v289 = vunpack.c.l.b16 %v72
    %v290 = vunpack.c.h.b16 %v72
    %v291 = vunpack.c.l.b16 %v73
    %v292 = vunpack.c.l.b16 %v74
    %v293 = vunpack.c.h.b16 %v74
    %v294 = vunpack.c.l.b16 %v75
    %v295 = vunpack.c.l.b16 %v76
    %v296 = vunpack.c.h.b16 %v76
    %v297 = vunpack.c.l.b16 %v77
    %v298 = vunpack.c.l.b16 %v78
    %v299 = vunpack.c.h.b16 %v78
    %v300 = vunpack.c.l.b16 %v79
    %v301 = vunpack.c.l.b16 %v80
    %v302 = vunpack.c.h.b16 %v80
    %v303 = vunpack.c.l.b16 %v81
    %v304 = vunpack.c.l.b16 %v82
    %v305 = vunpack.c.h.b16 %v82
    %v306 = vunpack.c.l.b16 %v83
    %v307 = vunpack.c.l.b16 %v84
    %v308 = vunpack.c.h.b16 %v84
    %v309 = vunpack.c.l.b16 %v85
    %v310 = vunpack.c.l.b16 %v86
    %v311 = vunpack.c.h.b16 %v86
    %v312 = vunpack.c.l.b16 %v87
    %v313 = vunpack.c.l.b16 %v88
    %v314 = vunpack.c.h.b16 %v88
    %v315 = vunpack.c.l.b16 %v89
    %v316 = vunpack.c.l.b16 %v90
    %v317 = vunpack.c.h.b16 %v90
    %v318 = vunpack.c.l.b16 %v91
    %v319 = vunpack.c.l.b16 %v92
    %v320 = vunpack.c.h.b16 %v92
    %v321 = vunpack.c.l.b16 %v93
    %v322 = vunpack.c.l.b16 %v94
    %v323 = vunpack.c.h.b16 %v94
    %v324 = vunpack.c.l.b16 %v95
    %v325 = vunpack.c.l.b16 %v96
    %v326 = vunpack.c.h.b16 %v96
    %v327 = vunpack.c.l.b16 %v97
    %v328 = vunpack.c.l.b16 %v98
    %v329 = vunpack.c.h.b16 %v98
    %v330 = vunpack.c.l.b16 %v99
    %v331 = vunpack.c.l.b16 %v100
    %v332 = vunpack.c.h.b16 %v100
    %v333 = vunpack.c.l.b16 %v101
    %v334 = vunpack.c.l.b16 %v102
    %v335 = vunpack.c.h.b16 %v102
    %v336 = vunpack.c.l.b16 %v103
    %v337 = vunpack.c.l.b16 %v104
    %v338 = vunpack.c.h.b16 %v104
    %v339 = vunpack.c.l.b16 %v105
    %v340 = vunpack.c.l.b16 %v106
    %v341 = vunpack.c.h.b16 %v106
    %v342 = vunpack.c.l.b16 %v107
    %v343 = vunpack.c.l.b16 %v108
    %v344 = vunpack.c.h.b16 %v108
    %v345 = vunpack.c.l.b16 %v109
    %v346 = vunpack.c.l.b16 %v110
    %v347 = vunpack.c.h.b16 %v110
    %v348 = vunpack.c.l.b16 %v111
    %v349 = vunpack.c.l.b16 %v112
    %v350 = vunpack.c.h.b16 %v112
    %v351 = vunpack.c.l.b16 %v113
    %v352 = vunpack.c.l.b16 %v114
    %v353 = vunpack.c.h.b16 %v114
    %v354 = vunpack.c.l.b16 %v115
    %v355 = vunpack.c.l.b16 %v116
    %v356 = vunpack.c.h.b16 %v116
    %v357 = vunpack.c.l.b16 %v117
    %v358 = vunpack.c.l.b16 %v118
    %v359 = vunpack.c.h.b16 %v118
    %v360 = vunpack.c.l.b16 %v119
    %v361 = vunpack.c.l.b16 %v120
    %v362 = vunpack.c.h.b16 %v120
    %v363 = vunpack.c.l.b16 %v121
    %v364 = vunpack.c.l.b16 %v122
    %v365 = vunpack.c.h.b16 %v122
    %v366 = vunpack.c.l.b16 %v123
    %v367 = vunpack.c.l.b16 %v124
    %v368 = vunpack.c.h.b16 %v124
    %v369 = vunpack.c.l.b16 %v125
    %v370 = vunpack.c.l.b16 %v126
    %v371 = vunpack.c.h.b16 %v126
    %v372 = vunpack.c.l.b16 %v127
    %v373 = vunpack.c.l.b16 %v128
    %v374 = vunpack.c.h.b16 %v128
    %v375 = vunpack.c.l.b16 %v129
    %v376 = vunpack.c.l.b16 %v130
    %v377 = vunpack.c.h.b16 %v130
    %v378 = vunpack.c.l.b16 %v131
    %v379 = vunpack.c.l.b16 %v132
    %v380 = vunpack.c.h.b16 %v132
    %v381 = vunpack.c.l.b16 %v133
    %v382 = vunpack.c.l.b16 %v134
    %v383 = vunpack.c.h.b16 %v134
    %v384 = vunpack.c.l.b16 %v135
    %v385 = vunpack.c.l.b16 %v136
    %v386 = vunpack.c.h.b16 %v136
    %v387 = vunpack.c.l.b16 %v137
    %v388 = vunpack.c.l.b16 %v138
    %v389 = vunpack.c.h.b16 %v138
    %v390 = vunpack.c.l.b16 %v139
    %v391 = vunpack.c.l.b16 %v140
    %v392 = vunpack.c.h.b16 %v140
    %v393 = vunpack.c.l.b16 %v141
    %v394 = vunpack.c.l.b16 %v142
    %v395 = vunpack.c.h.b16 %v142
    %v396 = vunpack.c.l.b16 %v143
    %v397 = vunpack.c.l.b16 %v144
    %v398 = vunpack.c.h.b16 %v144
    %v399 = vunpack.c.l.b16 %v145
    %v400 = vunpack.c.l.b16 %v146
    %v401 = vunpack.c.h.b16 %v146
    %v402 = vunpack.c.l.b16 %v147
    %v403 = vunpack.c.l.b16 %v148
    %v404 = vunpack.c.h.b16 %v148
    %v405 = vunpack.c.l.b16 %v149
    %v406 = vunpack.c.l.b16 %v150
    %v407 = vunpack.c.h.b16 %v150
    %v408 = vunpack.c.l.b16 %v151
    %v409 = vunpack.c.l.b16 %v152
    %v410 = vunpack.c.h.b16 %v152
    %v411 = vunpack.c.l.b16 %v153
    %v412 = vunpack.c.l.b16 %v154
    %v413 = vunpack.c.h.b16 %v154
    %v414 = vunpack.c.l.b16 %v155
    %v415 = vpack.c.b16 %v274, %v271
    %v416 = vpack.c.b16 %v275, %v272
    %v417 = vpack.c.b16 %v276, %v273
    %v418 = vpack.c.b16 %v280, %v277
    %v419 = vpack.c.b16 %v281, %v278
    %v420 = vpack.c.b16 %v282, %v279
    %v421 = vpack.c.b16 %v286, %v283
    %v422 = vpack.c.b16 %v287, %v284
    %v423 = vpack.c.b16 %v288, %v285
    %v424 = vpack.c.b16 %v292, %v289
    %v425 = vpack.c.b16 %v293, %v290
    %v426 = vpack.c.b16 %v294, %v291
    %v427 = vpack.c.b16 %v298, %v295
    %v428 = vpack.c.b16 %v299, %v296
    %v429 = vpack.c.b16 %v300, %v297
    %v430 = vpack.c.b16 %v304, %v301
    %v431 = vpack.c.b16 %v305, %v302
    %v432 = vpack.c.b16 %v306, %v303
    %v433 = vpack.c.b16 %v310, %v307
    %v434 = vpack.c.b16 %v311, %v308
    %v435 = vpack.c.b16 %v312, %v309
    %v436 = vpack.c.b16 %v316, %v313
    %v437 = vpack.c.b16 %v317, %v314
    %v438 = vpack.c.b16 %v318, %v315
    %v439 = vpack.c.b16 %v322, %v319
    %v440 = vpack.c.b16 %v323, %v320
    %v441 = vpack.c.b16 %v324, %v321
    %v442 = vpack.c.b16 %v328, %v325
    %v443 = vpack.c.b16 %v329, %v326
    %v444 = vpack.c.b16 %v330, %v327
    %v445 = vpack.c.b16 %v334, %v331
    %v446 = vpack.c.b16 %v335, %v332
    %v447 = vpack.c.b16 %v336, %v333
    %v448 = vpack.c.b16 %v340, %v337
    %v449 = vpack.c.b16 %v341, %v338
    %v450 = vpack.c.b16 %v342, %v339
    %v451 = vpack.c.b16 %v346, %v343
    %v452 = vpack.c.b16 %v347, %v344
    %v453 = vpack.c.b16 %v348, %v345
    %v454 = vpack.c.b16 %v352, %v349
    %v455 = vpack.c.b16 %v353, %v350
    %v456 = vpack.c.b16 %v354, %v351
    %v457 = vpack.c.b16 %v358, %v355
    %v458 = vpack.c.b16 %v359, %v356
    %v459 = vpack.c.b16 %v360, %v357
    %v460 = vpack.c.b16 %v364, %v361
    %v461 = vpack.c.b16 %v365, %v362
    %v462 = vpack.c.b16 %v366, %v363
    %v463 = vpack.c.b16 %v370, %v367
    %v464 = vpack.c.b16 %v371, %v368
    %v465 = vpack.c.b16 %v372, %v369
    %v466 = vpack.c.b16 %v376, %v373
    %v467 = vpack.c.b16 %v377, %v374
    %v468 = vpack.c.b16 %v378, %v375
    %v469 = vpack.c.b16 %v382, %v379
    %v470 = vpack.c.b16 %v383, %v380
    %v471 = vpack.c.b16 %v384, %v381
    %v472 = vpack.c.b16 %v388, %v385
    %v473 = vpack.c.b16 %v389, %v386
    %v474 = vpack.c.b16 %v390, %v387
    %v475 = vpack.c.b16 %v394, %v391
    %v476 = vpack.c.b16 %v395, %v392
    %v477 = vpack.c.b16 %v396, %v393
    %v478 = vpack.c.b16 %v400, %v397
    %v479 = vpack.c.b16 %v401, %v398
    %v480 = vpack.c.b16 %v402, %v399
    %v481 = vpack.c.b16 %v406, %v403
    %v482 = vpack.c.b16 %v407, %v404
    %v483 = vpack.c.b16 %v408, %v405
    %v484 = vpack.c.b16 %v412, %v409
    %v485 = vpack.c.b16 %v413, %v410
    %v486 = vpack.c.b16 %v414, %v411
    %559 = vmatpush.bf16.msra.mxu0 %v436
    %560 = vmatpush.bf16.msra.mxu0 %v433
    %561 = vmatpush.bf16.msra.mxu0 %v430
    %562 = vmatpush.bf16.msra.mxu0 %v427
    %563 = vmatpush.bf16.msra.mxu0 %v424
    %564 = vmatpush.bf16.msra.mxu0 %v421
    %565 = vmatpush.bf16.msra.mxu0 %v418
    %566 = vmatpush.bf16.msra.mxu0 %v415
    %567 = vmatmul.bf16.gmra.mxu0 %v169
    %v568 = vpop.f32.mrf.mxu0
    %v569 = vadd.f32 %v158, %v568
    %v570 = vpop.f32.mrf.mxu0
    %571 = vdwg.mxu0
    %572 = vmatpush.bf16.msra.mxu0 %v460
    %573 = vmatpush.bf16.msra.mxu0 %v457
    %574 = vmatpush.bf16.msra.mxu0 %v454
    %575 = vmatpush.bf16.msra.mxu0 %v451
    %576 = vmatpush.bf16.msra.mxu0 %v448
    %577 = vmatpush.bf16.msra.mxu0 %v445
    %578 = vmatpush.bf16.msra.mxu0 %v442
    %579 = vmatpush.bf16.msra.mxu0 %v439
    %580 = vmatmul.bf16.gmra.mxu0 %v170
    %v581 = vpop.f32.mrf.mxu0
    %v582 = vadd.f32 %v569, %v581
    %v583 = vpop.f32.mrf.mxu0
    %584 = vdwg.mxu0
    %585 = vmatpush.bf16.msra.mxu0 %v484
    %586 = vmatpush.bf16.msra.mxu0 %v481
    %587 = vmatpush.bf16.msra.mxu0 %v478
    %588 = vmatpush.bf16.msra.mxu0 %v475
    %589 = vmatpush.bf16.msra.mxu0 %v472
    %590 = vmatpush.bf16.msra.mxu0 %v469
    %591 = vmatpush.bf16.msra.mxu0 %v466
    %592 = vmatpush.bf16.msra.mxu0 %v463
    %593 = vmatmul.bf16.gmra.mxu0 %v171
    %v594 = vpop.f32.mrf.mxu0
    %v595 = vadd.f32 %v582, %v594
    %v596 = vpop.f32.mrf.mxu0
    %597 = vdwg.mxu0
    %598 = vmatpush.bf16.msra.mxu0 %v437
    %599 = vmatpush.bf16.msra.mxu0 %v434
    %600 = vmatpush.bf16.msra.mxu0 %v431
    %601 = vmatpush.bf16.msra.mxu0 %v428
    %602 = vmatpush.bf16.msra.mxu0 %v425
    %603 = vmatpush.bf16.msra.mxu0 %v422
    %604 = vmatpush.bf16.msra.mxu0 %v419
    %605 = vmatpush.bf16.msra.mxu0 %v416
    %606 = vmatmul.bf16.gmra.mxu0 %v169
    %v607 = vpop.f32.mrf.mxu0
    %v608 = vadd.f32 %v159, %v607
    %v609 = vpop.f32.mrf.mxu0
    %610 = vdwg.mxu0
    %611 = vmatpush.bf16.msra.mxu0 %v461
    %612 = vmatpush.bf16.msra.mxu0 %v458
    %613 = vmatpush.bf16.msra.mxu0 %v455
    %614 = vmatpush.bf16.msra.mxu0 %v452
    %615 = vmatpush.bf16.msra.mxu0 %v449
    %616 = vmatpush.bf16.msra.mxu0 %v446
    %617 = vmatpush.bf16.msra.mxu0 %v443
    %618 = vmatpush.bf16.msra.mxu0 %v440
    %619 = vmatmul.bf16.gmra.mxu0 %v170
    %v620 = vpop.f32.mrf.mxu0
    %v621 = vadd.f32 %v608, %v620
    %v622 = vpop.f32.mrf.mxu0
    %623 = vdwg.mxu0
    %624 = vmatpush.bf16.msra.mxu0 %v485
    %625 = vmatpush.bf16.msra.mxu0 %v482
    %626 = vmatpush.bf16.msra.mxu0 %v479
    %627 = vmatpush.bf16.msra.mxu0 %v476
    %628 = vmatpush.bf16.msra.mxu0 %v473
    %629 = vmatpush.bf16.msra.mxu0 %v470
    %630 = vmatpush.bf16.msra.mxu0 %v467
    %631 = vmatpush.bf16.msra.mxu0 %v464
    %632 = vmatmul.bf16.gmra.mxu0 %v171
    %v633 = vpop.f32.mrf.mxu0
    %v634 = vadd.f32 %v621, %v633
    %v635 = vpop.f32.mrf.mxu0
    %636 = vdwg.mxu0
    %637 = vmatpush.bf16.msra.mxu0 %v438
    %638 = vmatpush.bf16.msra.mxu0 %v435
    %639 = vmatpush.bf16.msra.mxu0 %v432
    %640 = vmatpush.bf16.msra.mxu0 %v429
    %641 = vmatpush.bf16.msra.mxu0 %v426
    %642 = vmatpush.bf16.msra.mxu0 %v423
    %643 = vmatpush.bf16.msra.mxu0 %v420
    %644 = vmatpush.bf16.msra.mxu0 %v417
    %645 = vmatmul.bf16.gmra.mxu0 %v169
    %v646 = vpop.f32.mrf.mxu0
    %v647 = vadd.f32 %v160, %v646
    %v648 = vpop.f32.mrf.mxu0
    %649 = vdwg.mxu0
    %650 = vmatpush.bf16.msra.mxu0 %v462
    %651 = vmatpush.bf16.msra.mxu0 %v459
    %652 = vmatpush.bf16.msra.mxu0 %v456
    %653 = vmatpush.bf16.msra.mxu0 %v453
    %654 = vmatpush.bf16.msra.mxu0 %v450
    %655 = vmatpush.bf16.msra.mxu0 %v447
    %656 = vmatpush.bf16.msra.mxu0 %v444
    %657 = vmatpush.bf16.msra.mxu0 %v441
    %658 = vmatmul.bf16.gmra.mxu0 %v170
    %v659 = vpop.f32.mrf.mxu0
    %v660 = vadd.f32 %v647, %v659
    %v661 = vpop.f32.mrf.mxu0
    %662 = vdwg.mxu0
    %663 = vmatpush.bf16.msra.mxu0 %v486
    %664 = vmatpush.bf16.msra.mxu0 %v483
    %665 = vmatpush.bf16.msra.mxu0 %v480
    %666 = vmatpush.bf16.msra.mxu0 %v477
    %667 = vmatpush.bf16.msra.mxu0 %v474
    %668 = vmatpush.bf16.msra.mxu0 %v471
    %669 = vmatpush.bf16.msra.mxu0 %v468
    %670 = vmatpush.bf16.msra.mxu0 %v465
    %671 = vmatmul.bf16.gmra.mxu0 %v171
    %v672 = vpop.f32.mrf.mxu0
    %v673 = vadd.f32 %v660, %v672
    %v674 = vpop.f32.mrf.mxu0
    %675 = vdwg.mxu0
    %v676 = vmax.f32 %v595, 0.0
    %v677 = vmax.f32 %v634, 0.0
    %v678 = vmax.f32 %v673, 0.0
    %v679 = vpack.c.bf16 %v676, %v676
    %v680 = vpack.c.bf16 %v677, %v677
    %v681 = vpack.c.bf16 %v678, %v678
    %s682 = scalar_lea.vmem [#allocation5], 576
    %v683 = vld [vmem:[%s682] sm:$0xff]
    %v684 = vld [vmem:[%s682 + $0x8] sm:$0xf]
    %v685 = vld [vmem:[%s682 + $0xc] sm:$0xff]
    %v686 = vld [vmem:[%s682 + $0x14] sm:$0xf]
    %v687 = vld [vmem:[%s682 + $0x18] sm:$0xff]
    %v688 = vld [vmem:[%s682 + $0x20] sm:$0xf]
    %v689 = vld [vmem:[%s682 + $0x24] sm:$0xff]
    %v690 = vld [vmem:[%s682 + $0x2c] sm:$0xf]
    %v691 = vld [vmem:[%s682 + $0x30] sm:$0xff]
    %v692 = vld [vmem:[%s682 + $0x38] sm:$0xf]
    %v693 = vld [vmem:[%s682 + $0x3c] sm:$0xff]
    %v694 = vld [vmem:[%s682 + $0x44] sm:$0xf]
    %v695 = vld [vmem:[%s682 + $0x48] sm:$0xff]
    %v696 = vld [vmem:[%s682 + $0x50] sm:$0xf]
    %v697 = vld [vmem:[%s682 + $0x54] sm:$0xff]
    %v698 = vld [vmem:[%s682 + $0x5c] sm:$0xf]
    %v699 = vld [vmem:[%s682 + $0x60] sm:$0xff]
    %v700 = vld [vmem:[%s682 + $0x68] sm:$0xf]
    %v701 = vld [vmem:[%s682 + $0x6c] sm:$0xff]
    %v702 = vld [vmem:[%s682 + $0x74] sm:$0xf]
    %v703 = vld [vmem:[%s682 + $0x78] sm:$0xff]
    %v704 = vld [vmem:[%s682 + $0x80] sm:$0xf]
    %v705 = vld [vmem:[%s682 + $0x84] sm:$0xff]
    %v706 = vld [vmem:[%s682 + $0x8c] sm:$0xf]
    %v707 = vld [vmem:[%s682 + $0x90] sm:$0xff]
    %v708 = vld [vmem:[%s682 + $0x98] sm:$0xf]
    %v709 = vld [vmem:[%s682 + $0x9c] sm:$0xff]
    %v710 = vld [vmem:[%s682 + $0xa4] sm:$0xf]
    %v711 = vld [vmem:[%s682 + $0xa8] sm:$0xff]
    %v712 = vld [vmem:[%s682 + $0xb0] sm:$0xf]
    %v713 = vld [vmem:[%s682 + $0xb4] sm:$0xff]
    %v714 = vld [vmem:[%s682 + $0xbc] sm:$0xf]
    %v715 = vld [vmem:[%s682 + $0xc0] sm:$0xff]
    %v716 = vld [vmem:[%s682 + $0xc8] sm:$0xf]
    %v717 = vld [vmem:[%s682 + $0xcc] sm:$0xff]
    %v718 = vld [vmem:[%s682 + $0xd4] sm:$0xf]
    %v719 = vld [vmem:[%s682 + $0xd8] sm:$0xff]
    %v720 = vld [vmem:[%s682 + $0xe0] sm:$0xf]
    %v721 = vld [vmem:[%s682 + $0xe4] sm:$0xff]
    %v722 = vld [vmem:[%s682 + $0xec] sm:$0xf]
    %v723 = vld [vmem:[%s682 + $0xf0] sm:$0xff]
    %v724 = vld [vmem:[%s682 + $0xf8] sm:$0xf]
    %v725 = vld [vmem:[%s682 + $0xfc] sm:$0xff]
    %v726 = vld [vmem:[%s682 + $0x104] sm:$0xf]
    %v727 = vld [vmem:[%s682 + $0x108] sm:$0xff]
    %v728 = vld [vmem:[%s682 + $0x110] sm:$0xf]
    %v729 = vld [vmem:[%s682 + $0x114] sm:$0xff]
    %v730 = vld [vmem:[%s682 + $0x11c] sm:$0xf]
    %v731 = vld [vmem:[%s682 + $0x120] sm:$0xff]
    %v732 = vld [vmem:[%s682 + $0x128] sm:$0xf]
    %v733 = vld [vmem:[%s682 + $0x12c] sm:$0xff]
    %v734 = vld [vmem:[%s682 + $0x134] sm:$0xf]
    %v735 = vld [vmem:[%s682 + $0x138] sm:$0xff]
    %v736 = vld [vmem:[%s682 + $0x140] sm:$0xf]
    %v737 = vld [vmem:[%s682 + $0x144] sm:$0xff]
    %v738 = vld [vmem:[%s682 + $0x14c] sm:$0xf]
    %v739 = vld [vmem:[%s682 + $0x150] sm:$0xff]
    %v740 = vld [vmem:[%s682 + $0x158] sm:$0xf]
    %v741 = vld [vmem:[%s682 + $0x15c] sm:$0xff]
    %v742 = vld [vmem:[%s682 + $0x164] sm:$0xf]
    %v743 = vld [vmem:[%s682 + $0x168] sm:$0xff]
    %v744 = vld [vmem:[%s682 + $0x170] sm:$0xf]
    %v745 = vld [vmem:[%s682 + $0x174] sm:$0xff]
    %v746 = vld [vmem:[%s682 + $0x17c] sm:$0xf]
    %v747 = vld [vmem:[%s682 + $0x180] sm:$0xff]
    %v748 = vld [vmem:[%s682 + $0x188] sm:$0xf]
    %v749 = vld [vmem:[%s682 + $0x18c] sm:$0xff]
    %v750 = vld [vmem:[%s682 + $0x194] sm:$0xf]
    %v751 = vld [vmem:[%s682 + $0x198] sm:$0xff]
    %v752 = vld [vmem:[%s682 + $0x1a0] sm:$0xf]
    %v753 = vld [vmem:[%s682 + $0x1a4] sm:$0xff]
    %v754 = vld [vmem:[%s682 + $0x1ac] sm:$0xf]
    %v755 = vld [vmem:[%s682 + $0x1b0] sm:$0xff]
    %v756 = vld [vmem:[%s682 + $0x1b8] sm:$0xf]
    %v757 = vld [vmem:[%s682 + $0x1bc] sm:$0xff]
    %v758 = vld [vmem:[%s682 + $0x1c4] sm:$0xf]
    %v759 = vld [vmem:[%s682 + $0x1c8] sm:$0xff]
    %v760 = vld [vmem:[%s682 + $0x1d0] sm:$0xf]
    %v761 = vld [vmem:[%s682 + $0x1d4] sm:$0xff]
    %v762 = vld [vmem:[%s682 + $0x1dc] sm:$0xf]
    %v763 = vld [vmem:[%s682 + $0x1e0] sm:$0xff]
    %v764 = vld [vmem:[%s682 + $0x1e8] sm:$0xf]
    %v765 = vld [vmem:[%s682 + $0x1ec] sm:$0xff]
    %v766 = vld [vmem:[%s682 + $0x1f4] sm:$0xf]
    %v767 = vld [vmem:[%s682 + $0x1f8] sm:$0xff]
    %v768 = vld [vmem:[%s682 + $0x200] sm:$0xf]
    %v769 = vld [vmem:[%s682 + $0x204] sm:$0xff]
    %v770 = vld [vmem:[%s682 + $0x20c] sm:$0xf]
    %v771 = vld [vmem:[%s682 + $0x210] sm:$0xff]
    %v772 = vld [vmem:[%s682 + $0x218] sm:$0xf]
    %v773 = vld [vmem:[%s682 + $0x21c] sm:$0xff]
    %v774 = vld [vmem:[%s682 + $0x224] sm:$0xf]
    %v775 = vld [vmem:[%s682 + $0x228] sm:$0xff]
    %v776 = vld [vmem:[%s682 + $0x230] sm:$0xf]
    %v777 = vld [vmem:[%s682 + $0x234] sm:$0xff]
    %v778 = vld [vmem:[%s682 + $0x23c] sm:$0xf]
    %s779 = scalar_lea.vmem [#allocation7], 1
    %v780 = vld [vmem:[%s779] ss:$8 sm:$0x7]
    %v782 = vperm.slane %v780, 0
    %v783 = vperm.slane %v780, 1
    %v784 = vperm.slane %v780, 2
    %v884 = vunpack.c.l.b16 %v683
    %v885 = vunpack.c.h.b16 %v683
    %v886 = vunpack.c.l.b16 %v684
    %v887 = vunpack.c.l.b16 %v685
    %v888 = vunpack.c.h.b16 %v685
    %v889 = vunpack.c.l.b16 %v686
    %v890 = vunpack.c.l.b16 %v687
    %v891 = vunpack.c.h.b16 %v687
    %v892 = vunpack.c.l.b16 %v688
    %v893 = vunpack.c.l.b16 %v689
    %v894 = vunpack.c.h.b16 %v689
    %v895 = vunpack.c.l.b16 %v690
    %v896 = vunpack.c.l.b16 %v691
    %v897 = vunpack.c.h.b16 %v691
    %v898 = vunpack.c.l.b16 %v692
    %v899 = vunpack.c.l.b16 %v693
    %v900 = vunpack.c.h.b16 %v693
    %v901 = vunpack.c.l.b16 %v694
    %v902 = vunpack.c.l.b16 %v695
    %v903 = vunpack.c.h.b16 %v695
    %v904 = vunpack.c.l.b16 %v696
    %v905 = vunpack.c.l.b16 %v697
    %v906 = vunpack.c.h.b16 %v697
    %v907 = vunpack.c.l.b16 %v698
    %v908 = vunpack.c.l.b16 %v699
    %v909 = vunpack.c.h.b16 %v699
    %v910 = vunpack.c.l.b16 %v700
    %v911 = vunpack.c.l.b16 %v701
    %v912 = vunpack.c.h.b16 %v701
    %v913 = vunpack.c.l.b16 %v702
    %v914 = vunpack.c.l.b16 %v703
    %v915 = vunpack.c.h.b16 %v703
    %v916 = vunpack.c.l.b16 %v704
    %v917 = vunpack.c.l.b16 %v705
    %v918 = vunpack.c.h.b16 %v705
    %v919 = vunpack.c.l.b16 %v706
    %v920 = vunpack.c.l.b16 %v707
    %v921 = vunpack.c.h.b16 %v707
    %v922 = vunpack.c.l.b16 %v708
    %v923 = vunpack.c.l.b16 %v709
    %v924 = vunpack.c.h.b16 %v709
    %v925 = vunpack.c.l.b16 %v710
    %v926 = vunpack.c.l.b16 %v711
    %v927 = vunpack.c.h.b16 %v711
    %v928 = vunpack.c.l.b16 %v712
    %v929 = vunpack.c.l.b16 %v713
    %v930 = vunpack.c.h.b16 %v713
    %v931 = vunpack.c.l.b16 %v714
    %v932 = vunpack.c.l.b16 %v715
    %v933 = vunpack.c.h.b16 %v715
    %v934 = vunpack.c.l.b16 %v716
    %v935 = vunpack.c.l.b16 %v717
    %v936 = vunpack.c.h.b16 %v717
    %v937 = vunpack.c.l.b16 %v718
    %v938 = vunpack.c.l.b16 %v719
    %v939 = vunpack.c.h.b16 %v719
    %v940 = vunpack.c.l.b16 %v720
    %v941 = vunpack.c.l.b16 %v721
    %v942 = vunpack.c.h.b16 %v721
    %v943 = vunpack.c.l.b16 %v722
    %v944 = vunpack.c.l.b16 %v723
    %v945 = vunpack.c.h.b16 %v723
    %v946 = vunpack.c.l.b16 %v724
    %v947 = vunpack.c.l.b16 %v725
    %v948 = vunpack.c.h.b16 %v725
    %v949 = vunpack.c.l.b16 %v726
    %v950 = vunpack.c.l.b16 %v727
    %v951 = vunpack.c.h.b16 %v727
    %v952 = vunpack.c.l.b16 %v728
    %v953 = vunpack.c.l.b16 %v729
    %v954 = vunpack.c.h.b16 %v729
    %v955 = vunpack.c.l.b16 %v730
    %v956 = vunpack.c.l.b16 %v731
    %v957 = vunpack.c.h.b16 %v731
    %v958 = vunpack.c.l.b16 %v732
    %v959 = vunpack.c.l.b16 %v733
    %v960 = vunpack.c.h.b16 %v733
    %v961 = vunpack.c.l.b16 %v734
    %v962 = vunpack.c.l.b16 %v735
    %v963 = vunpack.c.h.b16 %v735
    %v964 = vunpack.c.l.b16 %v736
    %v965 = vunpack.c.l.b16 %v737
    %v966 = vunpack.c.h.b16 %v737
    %v967 = vunpack.c.l.b16 %v738
    %v968 = vunpack.c.l.b16 %v739
    %v969 = vunpack.c.h.b16 %v739
    %v970 = vunpack.c.l.b16 %v740
    %v971 = vunpack.c.l.b16 %v741
    %v972 = vunpack.c.h.b16 %v741
    %v973 = vunpack.c.l.b16 %v742
    %v974 = vunpack.c.l.b16 %v743
    %v975 = vunpack.c.h.b16 %v743
    %v976 = vunpack.c.l.b16 %v744
    %v977 = vunpack.c.l.b16 %v745
    %v978 = vunpack.c.h.b16 %v745
    %v979 = vunpack.c.l.b16 %v746
    %v980 = vunpack.c.l.b16 %v747
    %v981 = vunpack.c.h.b16 %v747
    %v982 = vunpack.c.l.b16 %v748
    %v983 = vunpack.c.l.b16 %v749
    %v984 = vunpack.c.h.b16 %v749
    %v985 = vunpack.c.l.b16 %v750
    %v986 = vunpack.c.l.b16 %v751
    %v987 = vunpack.c.h.b16 %v751
    %v988 = vunpack.c.l.b16 %v752
    %v989 = vunpack.c.l.b16 %v753
    %v990 = vunpack.c.h.b16 %v753
    %v991 = vunpack.c.l.b16 %v754
    %v992 = vunpack.c.l.b16 %v755
    %v993 = vunpack.c.h.b16 %v755
    %v994 = vunpack.c.l.b16 %v756
    %v995 = vunpack.c.l.b16 %v757
    %v996 = vunpack.c.h.b16 %v757
    %v997 = vunpack.c.l.b16 %v758
    %v998 = vunpack.c.l.b16 %v759
    %v999 = vunpack.c.h.b16 %v759
    %v1000 = vunpack.c.l.b16 %v760
    %v1001 = vunpack.c.l.b16 %v761
    %v1002 = vunpack.c.h.b16 %v761
    %v1003 = vunpack.c.l.b16 %v762
    %v1004 = vunpack.c.l.b16 %v763
    %v1005 = vunpack.c.h.b16 %v763
    %v1006 = vunpack.c.l.b16 %v764
    %v1007 = vunpack.c.l.b16 %v765
    %v1008 = vunpack.c.h.b16 %v765
    %v1009 = vunpack.c.l.b16 %v766
    %v1010 = vunpack.c.l.b16 %v767
    %v1011 = vunpack.c.h.b16 %v767
    %v1012 = vunpack.c.l.b16 %v768
    %v1013 = vunpack.c.l.b16 %v769
    %v1014 = vunpack.c.h.b16 %v769
    %v1015 = vunpack.c.l.b16 %v770
    %v1016 = vunpack.c.l.b16 %v771
    %v1017 = vunpack.c.h.b16 %v771
    %v1018 = vunpack.c.l.b16 %v772
    %v1019 = vunpack.c.l.b16 %v773
    %v1020 = vunpack.c.h.b16 %v773
    %v1021 = vunpack.c.l.b16 %v774
    %v1022 = vunpack.c.l.b16 %v775
    %v1023 = vunpack.c.h.b16 %v775
    %v1024 = vunpack.c.l.b16 %v776
    %v1025 = vunpack.c.l.b16 %v777
    %v1026 = vunpack.c.h.b16 %v777
    %v1027 = vunpack.c.l.b16 %v778
    %v1028 = vpack.c.b16 %v887, %v884
    %v1029 = vpack.c.b16 %v888, %v885
    %v1030 = vpack.c.b16 %v889, %v886
    %v1031 = vpack.c.b16 %v893, %v890
    %v1032 = vpack.c.b16 %v894, %v891
    %v1033 = vpack.c.b16 %v895, %v892
    %v1034 = vpack.c.b16 %v899, %v896
    %v1035 = vpack.c.b16 %v900, %v897
    %v1036 = vpack.c.b16 %v901, %v898
    %v1037 = vpack.c.b16 %v905, %v902
    %v1038 = vpack.c.b16 %v906, %v903
    %v1039 = vpack.c.b16 %v907, %v904
    %v1040 = vpack.c.b16 %v911, %v908
    %v1041 = vpack.c.b16 %v912, %v909
    %v1042 = vpack.c.b16 %v913, %v910
    %v1043 = vpack.c.b16 %v917, %v914
    %v1044 = vpack.c.b16 %v918, %v915
    %v1045 = vpack.c.b16 %v919, %v916
    %v1046 = vpack.c.b16 %v923, %v920
    %v1047 = vpack.c.b16 %v924, %v921
    %v1048 = vpack.c.b16 %v925, %v922
    %v1049 = vpack.c.b16 %v929, %v926
    %v1050 = vpack.c.b16 %v930, %v927
    %v1051 = vpack.c.b16 %v931, %v928
    %v1052 = vpack.c.b16 %v935, %v932
    %v1053 = vpack.c.b16 %v936, %v933
    %v1054 = vpack.c.b16 %v937, %v934
    %v1055 = vpack.c.b16 %v941, %v938
    %v1056 = vpack.c.b16 %v942, %v939
    %v1057 = vpack.c.b16 %v943, %v940
    %v1058 = vpack.c.b16 %v947, %v944
    %v1059 = vpack.c.b16 %v948, %v945
    %v1060 = vpack.c.b16 %v949, %v946
    %v1061 = vpack.c.b16 %v953, %v950
    %v1062 = vpack.c.b16 %v954, %v951
    %v1063 = vpack.c.b16 %v955, %v952
    %v1064 = vpack.c.b16 %v959, %v956
    %v1065 = vpack.c.b16 %v960, %v957
    %v1066 = vpack.c.b16 %v961, %v958
    %v1067 = vpack.c.b16 %v965, %v962
    %v1068 = vpack.c.b16 %v966, %v963
    %v1069 = vpack.c.b16 %v967, %v964
    %v1070 = vpack.c.b16 %v971, %v968
    %v1071 = vpack.c.b16 %v972, %v969
    %v1072 = vpack.c.b16 %v973, %v970
    %v1073 = vpack.c.b16 %v977, %v974
    %v1074 = vpack.c.b16 %v978, %v975
    %v1075 = vpack.c.b16 %v979, %v976
    %v1076 = vpack.c.b16 %v983, %v980
    %v1077 = vpack.c.b16 %v984, %v981
    %v1078 = vpack.c.b16 %v985, %v982
    %v1079 = vpack.c.b16 %v989, %v986
    %v1080 = vpack.c.b16 %v990, %v987
    %v1081 = vpack.c.b16 %v991, %v988
    %v1082 = vpack.c.b16 %v995, %v992
    %v1083 = vpack.c.b16 %v996, %v993
    %v1084 = vpack.c.b16 %v997, %v994
    %v1085 = vpack.c.b16 %v1001, %v998
    %v1086 = vpack.c.b16 %v1002, %v999
    %v1087 = vpack.c.b16 %v1003, %v1000
    %v1088 = vpack.c.b16 %v1007, %v1004
    %v1089 = vpack.c.b16 %v1008, %v1005
    %v1090 = vpack.c.b16 %v1009, %v1006
    %v1091 = vpack.c.b16 %v1013, %v1010
    %v1092 = vpack.c.b16 %v1014, %v1011
    %v1093 = vpack.c.b16 %v1015, %v1012
    %v1094 = vpack.c.b16 %v1019, %v1016
    %v1095 = vpack.c.b16 %v1020, %v1017
    %v1096 = vpack.c.b16 %v1021, %v1018
    %v1097 = vpack.c.b16 %v1025, %v1022
    %v1098 = vpack.c.b16 %v1026, %v1023
    %v1099 = vpack.c.b16 %v1027, %v1024
    %1172 = vmatpush.bf16.msra.mxu0 %v1049
    %1173 = vmatpush.bf16.msra.mxu0 %v1046
    %1174 = vmatpush.bf16.msra.mxu0 %v1043
    %1175 = vmatpush.bf16.msra.mxu0 %v1040
    %1176 = vmatpush.bf16.msra.mxu0 %v1037
    %1177 = vmatpush.bf16.msra.mxu0 %v1034
    %1178 = vmatpush.bf16.msra.mxu0 %v1031
    %1179 = vmatpush.bf16.msra.mxu0 %v1028
    %1180 = vmatmul.bf16.gmra.mxu0 %v679
    %v1181 = vpop.f32.mrf.mxu0
    %v1182 = vadd.f32 %v782, %v1181
    %v1183 = vpop.f32.mrf.mxu0
    %1184 = vdwg.mxu0
    %1185 = vmatpush.bf16.msra.mxu0 %v1073
    %1186 = vmatpush.bf16.msra.mxu0 %v1070
    %1187 = vmatpush.bf16.msra.mxu0 %v1067
    %1188 = vmatpush.bf16.msra.mxu0 %v1064
    %1189 = vmatpush.bf16.msra.mxu0 %v1061
    %1190 = vmatpush.bf16.msra.mxu0 %v1058
    %1191 = vmatpush.bf16.msra.mxu0 %v1055
    %1192 = vmatpush.bf16.msra.mxu0 %v1052
    %1193 = vmatmul.bf16.gmra.mxu0 %v680
    %v1194 = vpop.f32.mrf.mxu0
    %v1195 = vadd.f32 %v1182, %v1194
    %v1196 = vpop.f32.mrf.mxu0
    %1197 = vdwg.mxu0
    %1198 = vmatpush.bf16.msra.mxu0 %v1097
    %1199 = vmatpush.bf16.msra.mxu0 %v1094
    %1200 = vmatpush.bf16.msra.mxu0 %v1091
    %1201 = vmatpush.bf16.msra.mxu0 %v1088
    %1202 = vmatpush.bf16.msra.mxu0 %v1085
    %1203 = vmatpush.bf16.msra.mxu0 %v1082
    %1204 = vmatpush.bf16.msra.mxu0 %v1079
    %1205 = vmatpush.bf16.msra.mxu0 %v1076
    %1206 = vmatmul.bf16.gmra.mxu0 %v681
    %v1207 = vpop.f32.mrf.mxu0
    %v1208 = vadd.f32 %v1195, %v1207
    %v1209 = vpop.f32.mrf.mxu0
    %1210 = vdwg.mxu0
    %1211 = vmatpush.bf16.msra.mxu0 %v1050
    %1212 = vmatpush.bf16.msra.mxu0 %v1047
    %1213 = vmatpush.bf16.msra.mxu0 %v1044
    %1214 = vmatpush.bf16.msra.mxu0 %v1041
    %1215 = vmatpush.bf16.msra.mxu0 %v1038
    %1216 = vmatpush.bf16.msra.mxu0 %v1035
    %1217 = vmatpush.bf16.msra.mxu0 %v1032
    %1218 = vmatpush.bf16.msra.mxu0 %v1029
    %1219 = vmatmul.bf16.gmra.mxu0 %v679
    %v1220 = vpop.f32.mrf.mxu0
    %v1221 = vadd.f32 %v783, %v1220
    %v1222 = vpop.f32.mrf.mxu0
    %1223 = vdwg.mxu0
    %1224 = vmatpush.bf16.msra.mxu0 %v1074
    %1225 = vmatpush.bf16.msra.mxu0 %v1071
    %1226 = vmatpush.bf16.msra.mxu0 %v1068
    %1227 = vmatpush.bf16.msra.mxu0 %v1065
    %1228 = vmatpush.bf16.msra.mxu0 %v1062
    %1229 = vmatpush.bf16.msra.mxu0 %v1059
    %1230 = vmatpush.bf16.msra.mxu0 %v1056
    %1231 = vmatpush.bf16.msra.mxu0 %v1053
    %1232 = vmatmul.bf16.gmra.mxu0 %v680
    %v1233 = vpop.f32.mrf.mxu0
    %v1234 = vadd.f32 %v1221, %v1233
    %v1235 = vpop.f32.mrf.mxu0
    %1236 = vdwg.mxu0
    %1237 = vmatpush.bf16.msra.mxu0 %v1098
    %1238 = vmatpush.bf16.msra.mxu0 %v1095
    %1239 = vmatpush.bf16.msra.mxu0 %v1092
    %1240 = vmatpush.bf16.msra.mxu0 %v1089
    %1241 = vmatpush.bf16.msra.mxu0 %v1086
    %1242 = vmatpush.bf16.msra.mxu0 %v1083
    %1243 = vmatpush.bf16.msra.mxu0 %v1080
    %1244 = vmatpush.bf16.msra.mxu0 %v1077
    %1245 = vmatmul.bf16.gmra.mxu0 %v681
    %v1246 = vpop.f32.mrf.mxu0
    %v1247 = vadd.f32 %v1234, %v1246
    %v1248 = vpop.f32.mrf.mxu0
    %1249 = vdwg.mxu0
    %1250 = vmatpush.bf16.msra.mxu0 %v1051
    %1251 = vmatpush.bf16.msra.mxu0 %v1048
    %1252 = vmatpush.bf16.msra.mxu0 %v1045
    %1253 = vmatpush.bf16.msra.mxu0 %v1042
    %1254 = vmatpush.bf16.msra.mxu0 %v1039
    %1255 = vmatpush.bf16.msra.mxu0 %v1036
    %1256 = vmatpush.bf16.msra.mxu0 %v1033
    %1257 = vmatpush.bf16.msra.mxu0 %v1030
    %1258 = vmatmul.bf16.gmra.mxu0 %v679
    %v1259 = vpop.f32.mrf.mxu0
    %v1260 = vadd.f32 %v784, %v1259
    %v1261 = vpop.f32.mrf.mxu0
    %1262 = vdwg.mxu0
    %1263 = vmatpush.bf16.msra.mxu0 %v1075
    %1264 = vmatpush.bf16.msra.mxu0 %v1072
    %1265 = vmatpush.bf16.msra.mxu0 %v1069
    %1266 = vmatpush.bf16.msra.mxu0 %v1066
    %1267 = vmatpush.bf16.msra.mxu0 %v1063
    %1268 = vmatpush.bf16.msra.mxu0 %v1060
    %1269 = vmatpush.bf16.msra.mxu0 %v1057
    %1270 = vmatpush.bf16.msra.mxu0 %v1054
    %1271 = vmatmul.bf16.gmra.mxu0 %v680
    %v1272 = vpop.f32.mrf.mxu0
    %v1273 = vadd.f32 %v1260, %v1272
    %v1274 = vpop.f32.mrf.mxu0
    %1275 = vdwg.mxu0
    %1276 = vmatpush.bf16.msra.mxu0 %v1099
    %1277 = vmatpush.bf16.msra.mxu0 %v1096
    %1278 = vmatpush.bf16.msra.mxu0 %v1093
    %1279 = vmatpush.bf16.msra.mxu0 %v1090
    %1280 = vmatpush.bf16.msra.mxu0 %v1087
    %1281 = vmatpush.bf16.msra.mxu0 %v1084
    %1282 = vmatpush.bf16.msra.mxu0 %v1081
    %1283 = vmatpush.bf16.msra.mxu0 %v1078
    %1284 = vmatmul.bf16.gmra.mxu0 %v681
    %v1285 = vpop.f32.mrf.mxu0
    %v1286 = vadd.f32 %v1273, %v1285
    %v1287 = vpop.f32.mrf.mxu0
    %1288 = vdwg.mxu0
    %v1289 = vmax.f32 %v1208, 0.0
    %v1290 = vmax.f32 %v1247, 0.0
    %v1291 = vmax.f32 %v1286, 0.0
    %v1292 = vpack.c.bf16 %v1289, %v1289
    %v1293 = vpack.c.bf16 %v1290, %v1290
    %v1294 = vpack.c.bf16 %v1291, %v1291
    %s1295 = scalar_lea.vmem [#allocation5], 1152
    %v1296 = vld [vmem:[%s1295] sm:$0xff]
    %v1297 = vld [vmem:[%s1295 + $0x8] sm:$0xf]
    %v1298 = vld [vmem:[%s1295 + $0xc] sm:$0xff]
    %v1299 = vld [vmem:[%s1295 + $0x14] sm:$0xf]
    %v1300 = vld [vmem:[%s1295 + $0x18] sm:$0xff]
    %v1301 = vld [vmem:[%s1295 + $0x20] sm:$0xf]
    %v1302 = vld [vmem:[%s1295 + $0x24] sm:$0xff]
    %v1303 = vld [vmem:[%s1295 + $0x2c] sm:$0xf]
    %v1304 = vld [vmem:[%s1295 + $0x30] sm:$0xff]
    %v1305 = vld [vmem:[%s1295 + $0x38] sm:$0xf]
    %v1306 = vld [vmem:[%s1295 + $0x3c] sm:$0xff]
    %v1307 = vld [vmem:[%s1295 + $0x44] sm:$0xf]
    %v1308 = vld [vmem:[%s1295 + $0x48] sm:$0xff]
    %v1309 = vld [vmem:[%s1295 + $0x50] sm:$0xf]
    %v1310 = vld [vmem:[%s1295 + $0x54] sm:$0xff]
    %v1311 = vld [vmem:[%s1295 + $0x5c] sm:$0xf]
    %v1312 = vld [vmem:[%s1295 + $0x60] sm:$0xff]
    %v1313 = vld [vmem:[%s1295 + $0x68] sm:$0xf]
    %v1314 = vld [vmem:[%s1295 + $0x6c] sm:$0xff]
    %v1315 = vld [vmem:[%s1295 + $0x74] sm:$0xf]
    %v1316 = vld [vmem:[%s1295 + $0x78] sm:$0xff]
    %v1317 = vld [vmem:[%s1295 + $0x80] sm:$0xf]
    %v1318 = vld [vmem:[%s1295 + $0x84] sm:$0xff]
    %v1319 = vld [vmem:[%s1295 + $0x8c] sm:$0xf]
    %v1320 = vld [vmem:[%s1295 + $0x90] sm:$0xff]
    %v1321 = vld [vmem:[%s1295 + $0x98] sm:$0xf]
    %v1322 = vld [vmem:[%s1295 + $0x9c] sm:$0xff]
    %v1323 = vld [vmem:[%s1295 + $0xa4] sm:$0xf]
    %v1324 = vld [vmem:[%s1295 + $0xa8] sm:$0xff]
    %v1325 = vld [vmem:[%s1295 + $0xb0] sm:$0xf]
    %v1326 = vld [vmem:[%s1295 + $0xb4] sm:$0xff]
    %v1327 = vld [vmem:[%s1295 + $0xbc] sm:$0xf]
    %v1328 = vld [vmem:[%s1295 + $0xc0] sm:$0xff]
    %v1329 = vld [vmem:[%s1295 + $0xc8] sm:$0xf]
    %v1330 = vld [vmem:[%s1295 + $0xcc] sm:$0xff]
    %v1331 = vld [vmem:[%s1295 + $0xd4] sm:$0xf]
    %v1332 = vld [vmem:[%s1295 + $0xd8] sm:$0xff]
    %v1333 = vld [vmem:[%s1295 + $0xe0] sm:$0xf]
    %v1334 = vld [vmem:[%s1295 + $0xe4] sm:$0xff]
    %v1335 = vld [vmem:[%s1295 + $0xec] sm:$0xf]
    %v1336 = vld [vmem:[%s1295 + $0xf0] sm:$0xff]
    %v1337 = vld [vmem:[%s1295 + $0xf8] sm:$0xf]
    %v1338 = vld [vmem:[%s1295 + $0xfc] sm:$0xff]
    %v1339 = vld [vmem:[%s1295 + $0x104] sm:$0xf]
    %v1340 = vld [vmem:[%s1295 + $0x108] sm:$0xff]
    %v1341 = vld [vmem:[%s1295 + $0x110] sm:$0xf]
    %v1342 = vld [vmem:[%s1295 + $0x114] sm:$0xff]
    %v1343 = vld [vmem:[%s1295 + $0x11c] sm:$0xf]
    %v1344 = vld [vmem:[%s1295 + $0x120] sm:$0xff]
    %v1345 = vld [vmem:[%s1295 + $0x128] sm:$0xf]
    %v1346 = vld [vmem:[%s1295 + $0x12c] sm:$0xff]
    %v1347 = vld [vmem:[%s1295 + $0x134] sm:$0xf]
    %v1348 = vld [vmem:[%s1295 + $0x138] sm:$0xff]
    %v1349 = vld [vmem:[%s1295 + $0x140] sm:$0xf]
    %v1350 = vld [vmem:[%s1295 + $0x144] sm:$0xff]
    %v1351 = vld [vmem:[%s1295 + $0x14c] sm:$0xf]
    %v1352 = vld [vmem:[%s1295 + $0x150] sm:$0xff]
    %v1353 = vld [vmem:[%s1295 + $0x158] sm:$0xf]
    %v1354 = vld [vmem:[%s1295 + $0x15c] sm:$0xff]
    %v1355 = vld [vmem:[%s1295 + $0x164] sm:$0xf]
    %v1356 = vld [vmem:[%s1295 + $0x168] sm:$0xff]
    %v1357 = vld [vmem:[%s1295 + $0x170] sm:$0xf]
    %v1358 = vld [vmem:[%s1295 + $0x174] sm:$0xff]
    %v1359 = vld [vmem:[%s1295 + $0x17c] sm:$0xf]
    %v1360 = vld [vmem:[%s1295 + $0x180] sm:$0xff]
    %v1361 = vld [vmem:[%s1295 + $0x188] sm:$0xf]
    %v1362 = vld [vmem:[%s1295 + $0x18c] sm:$0xff]
    %v1363 = vld [vmem:[%s1295 + $0x194] sm:$0xf]
    %v1364 = vld [vmem:[%s1295 + $0x198] sm:$0xff]
    %v1365 = vld [vmem:[%s1295 + $0x1a0] sm:$0xf]
    %v1366 = vld [vmem:[%s1295 + $0x1a4] sm:$0xff]
    %v1367 = vld [vmem:[%s1295 + $0x1ac] sm:$0xf]
    %v1368 = vld [vmem:[%s1295 + $0x1b0] sm:$0xff]
    %v1369 = vld [vmem:[%s1295 + $0x1b8] sm:$0xf]
    %v1370 = vld [vmem:[%s1295 + $0x1bc] sm:$0xff]
    %v1371 = vld [vmem:[%s1295 + $0x1c4] sm:$0xf]
    %v1372 = vld [vmem:[%s1295 + $0x1c8] sm:$0xff]
    %v1373 = vld [vmem:[%s1295 + $0x1d0] sm:$0xf]
    %v1374 = vld [vmem:[%s1295 + $0x1d4] sm:$0xff]
    %v1375 = vld [vmem:[%s1295 + $0x1dc] sm:$0xf]
    %v1376 = vld [vmem:[%s1295 + $0x1e0] sm:$0xff]
    %v1377 = vld [vmem:[%s1295 + $0x1e8] sm:$0xf]
    %v1378 = vld [vmem:[%s1295 + $0x1ec] sm:$0xff]
    %v1379 = vld [vmem:[%s1295 + $0x1f4] sm:$0xf]
    %v1380 = vld [vmem:[%s1295 + $0x1f8] sm:$0xff]
    %v1381 = vld [vmem:[%s1295 + $0x200] sm:$0xf]
    %v1382 = vld [vmem:[%s1295 + $0x204] sm:$0xff]
    %v1383 = vld [vmem:[%s1295 + $0x20c] sm:$0xf]
    %v1384 = vld [vmem:[%s1295 + $0x210] sm:$0xff]
    %v1385 = vld [vmem:[%s1295 + $0x218] sm:$0xf]
    %v1386 = vld [vmem:[%s1295 + $0x21c] sm:$0xff]
    %v1387 = vld [vmem:[%s1295 + $0x224] sm:$0xf]
    %v1388 = vld [vmem:[%s1295 + $0x228] sm:$0xff]
    %v1389 = vld [vmem:[%s1295 + $0x230] sm:$0xf]
    %v1390 = vld [vmem:[%s1295 + $0x234] sm:$0xff]
    %v1391 = vld [vmem:[%s1295 + $0x23c] sm:$0xf]
    %s1392 = scalar_lea.vmem [#allocation7], 2
    %v1393 = vld [vmem:[%s1392] ss:$8 sm:$0x7]
    %v1395 = vperm.slane %v1393, 0
    %v1396 = vperm.slane %v1393, 1
    %v1397 = vperm.slane %v1393, 2
    %v1497 = vunpack.c.l.b16 %v1296
    %v1498 = vunpack.c.h.b16 %v1296
    %v1499 = vunpack.c.l.b16 %v1297
    %v1500 = vunpack.c.l.b16 %v1298
    %v1501 = vunpack.c.h.b16 %v1298
    %v1502 = vunpack.c.l.b16 %v1299
    %v1503 = vunpack.c.l.b16 %v1300
    %v1504 = vunpack.c.h.b16 %v1300
    %v1505 = vunpack.c.l.b16 %v1301
    %v1506 = vunpack.c.l.b16 %v1302
    %v1507 = vunpack.c.h.b16 %v1302
    %v1508 = vunpack.c.l.b16 %v1303
    %v1509 = vunpack.c.l.b16 %v1304
    %v1510 = vunpack.c.h.b16 %v1304
    %v1511 = vunpack.c.l.b16 %v1305
    %v1512 = vunpack.c.l.b16 %v1306
    %v1513 = vunpack.c.h.b16 %v1306
    %v1514 = vunpack.c.l.b16 %v1307
    %v1515 = vunpack.c.l.b16 %v1308
    %v1516 = vunpack.c.h.b16 %v1308
    %v1517 = vunpack.c.l.b16 %v1309
    %v1518 = vunpack.c.l.b16 %v1310
    %v1519 = vunpack.c.h.b16 %v1310
    %v1520 = vunpack.c.l.b16 %v1311
    %v1521 = vunpack.c.l.b16 %v1312
    %v1522 = vunpack.c.h.b16 %v1312
    %v1523 = vunpack.c.l.b16 %v1313
    %v1524 = vunpack.c.l.b16 %v1314
    %v1525 = vunpack.c.h.b16 %v1314
    %v1526 = vunpack.c.l.b16 %v1315
    %v1527 = vunpack.c.l.b16 %v1316
    %v1528 = vunpack.c.h.b16 %v1316
    %v1529 = vunpack.c.l.b16 %v1317
    %v1530 = vunpack.c.l.b16 %v1318
    %v1531 = vunpack.c.h.b16 %v1318
    %v1532 = vunpack.c.l.b16 %v1319
    %v1533 = vunpack.c.l.b16 %v1320
    %v1534 = vunpack.c.h.b16 %v1320
    %v1535 = vunpack.c.l.b16 %v1321
    %v1536 = vunpack.c.l.b16 %v1322
    %v1537 = vunpack.c.h.b16 %v1322
    %v1538 = vunpack.c.l.b16 %v1323
    %v1539 = vunpack.c.l.b16 %v1324
    %v1540 = vunpack.c.h.b16 %v1324
    %v1541 = vunpack.c.l.b16 %v1325
    %v1542 = vunpack.c.l.b16 %v1326
    %v1543 = vunpack.c.h.b16 %v1326
    %v1544 = vunpack.c.l.b16 %v1327
    %v1545 = vunpack.c.l.b16 %v1328
    %v1546 = vunpack.c.h.b16 %v1328
    %v1547 = vunpack.c.l.b16 %v1329
    %v1548 = vunpack.c.l.b16 %v1330
    %v1549 = vunpack.c.h.b16 %v1330
    %v1550 = vunpack.c.l.b16 %v1331
    %v1551 = vunpack.c.l.b16 %v1332
    %v1552 = vunpack.c.h.b16 %v1332
    %v1553 = vunpack.c.l.b16 %v1333
    %v1554 = vunpack.c.l.b16 %v1334
    %v1555 = vunpack.c.h.b16 %v1334
    %v1556 = vunpack.c.l.b16 %v1335
    %v1557 = vunpack.c.l.b16 %v1336
    %v1558 = vunpack.c.h.b16 %v1336
    %v1559 = vunpack.c.l.b16 %v1337
    %v1560 = vunpack.c.l.b16 %v1338
    %v1561 = vunpack.c.h.b16 %v1338
    %v1562 = vunpack.c.l.b16 %v1339
    %v1563 = vunpack.c.l.b16 %v1340
    %v1564 = vunpack.c.h.b16 %v1340
    %v1565 = vunpack.c.l.b16 %v1341
    %v1566 = vunpack.c.l.b16 %v1342
    %v1567 = vunpack.c.h.b16 %v1342
    %v1568 = vunpack.c.l.b16 %v1343
    %v1569 = vunpack.c.l.b16 %v1344
    %v1570 = vunpack.c.h.b16 %v1344
    %v1571 = vunpack.c.l.b16 %v1345
    %v1572 = vunpack.c.l.b16 %v1346
    %v1573 = vunpack.c.h.b16 %v1346
    %v1574 = vunpack.c.l.b16 %v1347
    %v1575 = vunpack.c.l.b16 %v1348
    %v1576 = vunpack.c.h.b16 %v1348
    %v1577 = vunpack.c.l.b16 %v1349
    %v1578 = vunpack.c.l.b16 %v1350
    %v1579 = vunpack.c.h.b16 %v1350
    %v1580 = vunpack.c.l.b16 %v1351
    %v1581 = vunpack.c.l.b16 %v1352
    %v1582 = vunpack.c.h.b16 %v1352
    %v1583 = vunpack.c.l.b16 %v1353
    %v1584 = vunpack.c.l.b16 %v1354
    %v1585 = vunpack.c.h.b16 %v1354
    %v1586 = vunpack.c.l.b16 %v1355
    %v1587 = vunpack.c.l.b16 %v1356
    %v1588 = vunpack.c.h.b16 %v1356
    %v1589 = vunpack.c.l.b16 %v1357
    %v1590 = vunpack.c.l.b16 %v1358
    %v1591 = vunpack.c.h.b16 %v1358
    %v1592 = vunpack.c.l.b16 %v1359
    %v1593 = vunpack.c.l.b16 %v1360
    %v1594 = vunpack.c.h.b16 %v1360
    %v1595 = vunpack.c.l.b16 %v1361
    %v1596 = vunpack.c.l.b16 %v1362
    %v1597 = vunpack.c.h.b16 %v1362
    %v1598 = vunpack.c.l.b16 %v1363
    %v1599 = vunpack.c.l.b16 %v1364
    %v1600 = vunpack.c.h.b16 %v1364
    %v1601 = vunpack.c.l.b16 %v1365
    %v1602 = vunpack.c.l.b16 %v1366
    %v1603 = vunpack.c.h.b16 %v1366
    %v1604 = vunpack.c.l.b16 %v1367
    %v1605 = vunpack.c.l.b16 %v1368
    %v1606 = vunpack.c.h.b16 %v1368
    %v1607 = vunpack.c.l.b16 %v1369
    %v1608 = vunpack.c.l.b16 %v1370
    %v1609 = vunpack.c.h.b16 %v1370
    %v1610 = vunpack.c.l.b16 %v1371
    %v1611 = vunpack.c.l.b16 %v1372
    %v1612 = vunpack.c.h.b16 %v1372
    %v1613 = vunpack.c.l.b16 %v1373
    %v1614 = vunpack.c.l.b16 %v1374
    %v1615 = vunpack.c.h.b16 %v1374
    %v1616 = vunpack.c.l.b16 %v1375
    %v1617 = vunpack.c.l.b16 %v1376
    %v1618 = vunpack.c.h.b16 %v1376
    %v1619 = vunpack.c.l.b16 %v1377
    %v1620 = vunpack.c.l.b16 %v1378
    %v1621 = vunpack.c.h.b16 %v1378
    %v1622 = vunpack.c.l.b16 %v1379
    %v1623 = vunpack.c.l.b16 %v1380
    %v1624 = vunpack.c.h.b16 %v1380
    %v1625 = vunpack.c.l.b16 %v1381
    %v1626 = vunpack.c.l.b16 %v1382
    %v1627 = vunpack.c.h.b16 %v1382
    %v1628 = vunpack.c.l.b16 %v1383
    %v1629 = vunpack.c.l.b16 %v1384
    %v1630 = vunpack.c.h.b16 %v1384
    %v1631 = vunpack.c.l.b16 %v1385
    %v1632 = vunpack.c.l.b16 %v1386
    %v1633 = vunpack.c.h.b16 %v1386
    %v1634 = vunpack.c.l.b16 %v1387
    %v1635 = vunpack.c.l.b16 %v1388
    %v1636 = vunpack.c.h.b16 %v1388
    %v1637 = vunpack.c.l.b16 %v1389
    %v1638 = vunpack.c.l.b16 %v1390
    %v1639 = vunpack.c.h.b16 %v1390
    %v1640 = vunpack.c.l.b16 %v1391
    %v1641 = vpack.c.b16 %v1500, %v1497
    %v1642 = vpack.c.b16 %v1501, %v1498
    %v1643 = vpack.c.b16 %v1502, %v1499
    %v1644 = vpack.c.b16 %v1506, %v1503
    %v1645 = vpack.c.b16 %v1507, %v1504
    %v1646 = vpack.c.b16 %v1508, %v1505
    %v1647 = vpack.c.b16 %v1512, %v1509
    %v1648 = vpack.c.b16 %v1513, %v1510
    %v1649 = vpack.c.b16 %v1514, %v1511
    %v1650 = vpack.c.b16 %v1518, %v1515
    %v1651 = vpack.c.b16 %v1519, %v1516
    %v1652 = vpack.c.b16 %v1520, %v1517
    %v1653 = vpack.c.b16 %v1524, %v1521
    %v1654 = vpack.c.b16 %v1525, %v1522
    %v1655 = vpack.c.b16 %v1526, %v1523
    %v1656 = vpack.c.b16 %v1530, %v1527
    %v1657 = vpack.c.b16 %v1531, %v1528
    %v1658 = vpack.c.b16 %v1532, %v1529
    %v1659 = vpack.c.b16 %v1536, %v1533
    %v1660 = vpack.c.b16 %v1537, %v1534
    %v1661 = vpack.c.b16 %v1538, %v1535
    %v1662 = vpack.c.b16 %v1542, %v1539
    %v1663 = vpack.c.b16 %v1543, %v1540
    %v1664 = vpack.c.b16 %v1544, %v1541
    %v1665 = vpack.c.b16 %v1548, %v1545
    %v1666 = vpack.c.b16 %v1549, %v1546
    %v1667 = vpack.c.b16 %v1550, %v1547
    %v1668 = vpack.c.b16 %v1554, %v1551
    %v1669 = vpack.c.b16 %v1555, %v1552
    %v1670 = vpack.c.b16 %v1556, %v1553
    %v1671 = vpack.c.b16 %v1560, %v1557
    %v1672 = vpack.c.b16 %v1561, %v1558
    %v1673 = vpack.c.b16 %v1562, %v1559
    %v1674 = vpack.c.b16 %v1566, %v1563
    %v1675 = vpack.c.b16 %v1567, %v1564
    %v1676 = vpack.c.b16 %v1568, %v1565
    %v1677 = vpack.c.b16 %v1572, %v1569
    %v1678 = vpack.c.b16 %v1573, %v1570
    %v1679 = vpack.c.b16 %v1574, %v1571
    %v1680 = vpack.c.b16 %v1578, %v1575
    %v1681 = vpack.c.b16 %v1579, %v1576
    %v1682 = vpack.c.b16 %v1580, %v1577
    %v1683 = vpack.c.b16 %v1584, %v1581
    %v1684 = vpack.c.b16 %v1585, %v1582
    %v1685 = vpack.c.b16 %v1586, %v1583
    %v1686 = vpack.c.b16 %v1590, %v1587
    %v1687 = vpack.c.b16 %v1591, %v1588
    %v1688 = vpack.c.b16 %v1592, %v1589
    %v1689 = vpack.c.b16 %v1596, %v1593
    %v1690 = vpack.c.b16 %v1597, %v1594
    %v1691 = vpack.c.b16 %v1598, %v1595
    %v1692 = vpack.c.b16 %v1602, %v1599
    %v1693 = vpack.c.b16 %v1603, %v1600
    %v1694 = vpack.c.b16 %v1604, %v1601
    %v1695 = vpack.c.b16 %v1608, %v1605
    %v1696 = vpack.c.b16 %v1609, %v1606
    %v1697 = vpack.c.b16 %v1610, %v1607
    %v1698 = vpack.c.b16 %v1614, %v1611
    %v1699 = vpack.c.b16 %v1615, %v1612
    %v1700 = vpack.c.b16 %v1616, %v1613
    %v1701 = vpack.c.b16 %v1620, %v1617
    %v1702 = vpack.c.b16 %v1621, %v1618
    %v1703 = vpack.c.b16 %v1622, %v1619
    %v1704 = vpack.c.b16 %v1626, %v1623
    %v1705 = vpack.c.b16 %v1627, %v1624
    %v1706 = vpack.c.b16 %v1628, %v1625
    %v1707 = vpack.c.b16 %v1632, %v1629
    %v1708 = vpack.c.b16 %v1633, %v1630
    %v1709 = vpack.c.b16 %v1634, %v1631
    %v1710 = vpack.c.b16 %v1638, %v1635
    %v1711 = vpack.c.b16 %v1639, %v1636
    %v1712 = vpack.c.b16 %v1640, %v1637
    %1785 = vmatpush.bf16.msra.mxu0 %v1662
    %1786 = vmatpush.bf16.msra.mxu0 %v1659
    %1787 = vmatpush.bf16.msra.mxu0 %v1656
    %1788 = vmatpush.bf16.msra.mxu0 %v1653
    %1789 = vmatpush.bf16.msra.mxu0 %v1650
    %1790 = vmatpush.bf16.msra.mxu0 %v1647
    %1791 = vmatpush.bf16.msra.mxu0 %v1644
    %1792 = vmatpush.bf16.msra.mxu0 %v1641
    %1793 = vmatmul.bf16.gmra.mxu0 %v1292
    %v1794 = vpop.f32.mrf.mxu0
    %v1795 = vadd.f32 %v1395, %v1794
    %v1796 = vpop.f32.mrf.mxu0
    %1797 = vdwg.mxu0
    %1798 = vmatpush.bf16.msra.mxu0 %v1686
    %1799 = vmatpush.bf16.msra.mxu0 %v1683
    %1800 = vmatpush.bf16.msra.mxu0 %v1680
    %1801 = vmatpush.bf16.msra.mxu0 %v1677
    %1802 = vmatpush.bf16.msra.mxu0 %v1674
    %1803 = vmatpush.bf16.msra.mxu0 %v1671
    %1804 = vmatpush.bf16.msra.mxu0 %v1668
    %1805 = vmatpush.bf16.msra.mxu0 %v1665
    %1806 = vmatmul.bf16.gmra.mxu0 %v1293
    %v1807 = vpop.f32.mrf.mxu0
    %v1808 = vadd.f32 %v1795, %v1807
    %v1809 = vpop.f32.mrf.mxu0
    %1810 = vdwg.mxu0
    %1811 = vmatpush.bf16.msra.mxu0 %v1710
    %1812 = vmatpush.bf16.msra.mxu0 %v1707
    %1813 = vmatpush.bf16.msra.mxu0 %v1704
    %1814 = vmatpush.bf16.msra.mxu0 %v1701
    %1815 = vmatpush.bf16.msra.mxu0 %v1698
    %1816 = vmatpush.bf16.msra.mxu0 %v1695
    %1817 = vmatpush.bf16.msra.mxu0 %v1692
    %1818 = vmatpush.bf16.msra.mxu0 %v1689
    %1819 = vmatmul.bf16.gmra.mxu0 %v1294
    %v1820 = vpop.f32.mrf.mxu0
    %v1821 = vadd.f32 %v1808, %v1820
    %v1822 = vpop.f32.mrf.mxu0
    %1823 = vdwg.mxu0
    %1824 = vmatpush.bf16.msra.mxu0 %v1663
    %1825 = vmatpush.bf16.msra.mxu0 %v1660
    %1826 = vmatpush.bf16.msra.mxu0 %v1657
    %1827 = vmatpush.bf16.msra.mxu0 %v1654
    %1828 = vmatpush.bf16.msra.mxu0 %v1651
    %1829 = vmatpush.bf16.msra.mxu0 %v1648
    %1830 = vmatpush.bf16.msra.mxu0 %v1645
    %1831 = vmatpush.bf16.msra.mxu0 %v1642
    %1832 = vmatmul.bf16.gmra.mxu0 %v1292
    %v1833 = vpop.f32.mrf.mxu0
    %v1834 = vadd.f32 %v1396, %v1833
    %v1835 = vpop.f32.mrf.mxu0
    %1836 = vdwg.mxu0
    %1837 = vmatpush.bf16.msra.mxu0 %v1687
    %1838 = vmatpush.bf16.msra.mxu0 %v1684
    %1839 = vmatpush.bf16.msra.mxu0 %v1681
    %1840 = vmatpush.bf16.msra.mxu0 %v1678
    %1841 = vmatpush.bf16.msra.mxu0 %v1675
    %1842 = vmatpush.bf16.msra.mxu0 %v1672
    %1843 = vmatpush.bf16.msra.mxu0 %v1669
    %1844 = vmatpush.bf16.msra.mxu0 %v1666
    %1845 = vmatmul.bf16.gmra.mxu0 %v1293
    %v1846 = vpop.f32.mrf.mxu0
    %v1847 = vadd.f32 %v1834, %v1846
    %v1848 = vpop.f32.mrf.mxu0
    %1849 = vdwg.mxu0
    %1850 = vmatpush.bf16.msra.mxu0 %v1711
    %1851 = vmatpush.bf16.msra.mxu0 %v1708
    %1852 = vmatpush.bf16.msra.mxu0 %v1705
    %1853 = vmatpush.bf16.msra.mxu0 %v1702
    %1854 = vmatpush.bf16.msra.mxu0 %v1699
    %1855 = vmatpush.bf16.msra.mxu0 %v1696
    %1856 = vmatpush.bf16.msra.mxu0 %v1693
    %1857 = vmatpush.bf16.msra.mxu0 %v1690
    %1858 = vmatmul.bf16.gmra.mxu0 %v1294
    %v1859 = vpop.f32.mrf.mxu0
    %v1860 = vadd.f32 %v1847, %v1859
    %v1861 = vpop.f32.mrf.mxu0
    %1862 = vdwg.mxu0
    %1863 = vmatpush.bf16.msra.mxu0 %v1664
    %1864 = vmatpush.bf16.msra.mxu0 %v1661
    %1865 = vmatpush.bf16.msra.mxu0 %v1658
    %1866 = vmatpush.bf16.msra.mxu0 %v1655
    %1867 = vmatpush.bf16.msra.mxu0 %v1652
    %1868 = vmatpush.bf16.msra.mxu0 %v1649
    %1869 = vmatpush.bf16.msra.mxu0 %v1646
    %1870 = vmatpush.bf16.msra.mxu0 %v1643
    %1871 = vmatmul.bf16.gmra.mxu0 %v1292
    %v1872 = vpop.f32.mrf.mxu0
    %v1873 = vadd.f32 %v1397, %v1872
    %v1874 = vpop.f32.mrf.mxu0
    %1875 = vdwg.mxu0
    %1876 = vmatpush.bf16.msra.mxu0 %v1688
    %1877 = vmatpush.bf16.msra.mxu0 %v1685
    %1878 = vmatpush.bf16.msra.mxu0 %v1682
    %1879 = vmatpush.bf16.msra.mxu0 %v1679
    %1880 = vmatpush.bf16.msra.mxu0 %v1676
    %1881 = vmatpush.bf16.msra.mxu0 %v1673
    %1882 = vmatpush.bf16.msra.mxu0 %v1670
    %1883 = vmatpush.bf16.msra.mxu0 %v1667
    %1884 = vmatmul.bf16.gmra.mxu0 %v1293
    %v1885 = vpop.f32.mrf.mxu0
    %v1886 = vadd.f32 %v1873, %v1885
    %v1887 = vpop.f32.mrf.mxu0
    %1888 = vdwg.mxu0
    %1889 = vmatpush.bf16.msra.mxu0 %v1712
    %1890 = vmatpush.bf16.msra.mxu0 %v1709
    %1891 = vmatpush.bf16.msra.mxu0 %v1706
    %1892 = vmatpush.bf16.msra.mxu0 %v1703
    %1893 = vmatpush.bf16.msra.mxu0 %v1700
    %1894 = vmatpush.bf16.msra.mxu0 %v1697
    %1895 = vmatpush.bf16.msra.mxu0 %v1694
    %1896 = vmatpush.bf16.msra.mxu0 %v1691
    %1897 = vmatmul.bf16.gmra.mxu0 %v1294
    %v1898 = vpop.f32.mrf.mxu0
    %v1899 = vadd.f32 %v1886, %v1898
    %v1900 = vpop.f32.mrf.mxu0
    %1901 = vdwg.mxu0
    %v1902 = vmax.f32 %v1821, 0.0
    %v1903 = vmax.f32 %v1860, 0.0
    %v1904 = vmax.f32 %v1899, 0.0
    %v1905 = vpack.c.bf16 %v1902, %v1902
    %v1906 = vpack.c.bf16 %v1903, %v1903
    %v1907 = vpack.c.bf16 %v1904, %v1904
    %s1908 = scalar_lea.vmem [#allocation5], 1728
    %v1909 = vld [vmem:[%s1908] sm:$0xff]
    %v1910 = vld [vmem:[%s1908 + $0x8] sm:$0xf]
    %v1911 = vld [vmem:[%s1908 + $0xc] sm:$0xff]
    %v1912 = vld [vmem:[%s1908 + $0x14] sm:$0xf]
    %v1913 = vld [vmem:[%s1908 + $0x18] sm:$0xff]
    %v1914 = vld [vmem:[%s1908 + $0x20] sm:$0xf]
    %v1915 = vld [vmem:[%s1908 + $0x24] sm:$0xff]
    %v1916 = vld [vmem:[%s1908 + $0x2c] sm:$0xf]
    %v1917 = vld [vmem:[%s1908 + $0x30] sm:$0xff]
    %v1918 = vld [vmem:[%s1908 + $0x38] sm:$0xf]
    %v1919 = vld [vmem:[%s1908 + $0x3c] sm:$0xff]
    %v1920 = vld [vmem:[%s1908 + $0x44] sm:$0xf]
    %v1921 = vld [vmem:[%s1908 + $0x48] sm:$0xff]
    %v1922 = vld [vmem:[%s1908 + $0x50] sm:$0xf]
    %v1923 = vld [vmem:[%s1908 + $0x54] sm:$0xff]
    %v1924 = vld [vmem:[%s1908 + $0x5c] sm:$0xf]
    %v1925 = vld [vmem:[%s1908 + $0x60] sm:$0xff]
    %v1926 = vld [vmem:[%s1908 + $0x68] sm:$0xf]
    %v1927 = vld [vmem:[%s1908 + $0x6c] sm:$0xff]
    %v1928 = vld [vmem:[%s1908 + $0x74] sm:$0xf]
    %v1929 = vld [vmem:[%s1908 + $0x78] sm:$0xff]
    %v1930 = vld [vmem:[%s1908 + $0x80] sm:$0xf]
    %v1931 = vld [vmem:[%s1908 + $0x84] sm:$0xff]
    %v1932 = vld [vmem:[%s1908 + $0x8c] sm:$0xf]
    %v1933 = vld [vmem:[%s1908 + $0x90] sm:$0xff]
    %v1934 = vld [vmem:[%s1908 + $0x98] sm:$0xf]
    %v1935 = vld [vmem:[%s1908 + $0x9c] sm:$0xff]
    %v1936 = vld [vmem:[%s1908 + $0xa4] sm:$0xf]
    %v1937 = vld [vmem:[%s1908 + $0xa8] sm:$0xff]
    %v1938 = vld [vmem:[%s1908 + $0xb0] sm:$0xf]
    %v1939 = vld [vmem:[%s1908 + $0xb4] sm:$0xff]
    %v1940 = vld [vmem:[%s1908 + $0xbc] sm:$0xf]
    %v1941 = vld [vmem:[%s1908 + $0xc0] sm:$0xff]
    %v1942 = vld [vmem:[%s1908 + $0xc8] sm:$0xf]
    %v1943 = vld [vmem:[%s1908 + $0xcc] sm:$0xff]
    %v1944 = vld [vmem:[%s1908 + $0xd4] sm:$0xf]
    %v1945 = vld [vmem:[%s1908 + $0xd8] sm:$0xff]
    %v1946 = vld [vmem:[%s1908 + $0xe0] sm:$0xf]
    %v1947 = vld [vmem:[%s1908 + $0xe4] sm:$0xff]
    %v1948 = vld [vmem:[%s1908 + $0xec] sm:$0xf]
    %v1949 = vld [vmem:[%s1908 + $0xf0] sm:$0xff]
    %v1950 = vld [vmem:[%s1908 + $0xf8] sm:$0xf]
    %v1951 = vld [vmem:[%s1908 + $0xfc] sm:$0xff]
    %v1952 = vld [vmem:[%s1908 + $0x104] sm:$0xf]
    %v1953 = vld [vmem:[%s1908 + $0x108] sm:$0xff]
    %v1954 = vld [vmem:[%s1908 + $0x110] sm:$0xf]
    %v1955 = vld [vmem:[%s1908 + $0x114] sm:$0xff]
    %v1956 = vld [vmem:[%s1908 + $0x11c] sm:$0xf]
    %v1957 = vld [vmem:[%s1908 + $0x120] sm:$0xff]
    %v1958 = vld [vmem:[%s1908 + $0x128] sm:$0xf]
    %v1959 = vld [vmem:[%s1908 + $0x12c] sm:$0xff]
    %v1960 = vld [vmem:[%s1908 + $0x134] sm:$0xf]
    %v1961 = vld [vmem:[%s1908 + $0x138] sm:$0xff]
    %v1962 = vld [vmem:[%s1908 + $0x140] sm:$0xf]
    %v1963 = vld [vmem:[%s1908 + $0x144] sm:$0xff]
    %v1964 = vld [vmem:[%s1908 + $0x14c] sm:$0xf]
    %v1965 = vld [vmem:[%s1908 + $0x150] sm:$0xff]
    %v1966 = vld [vmem:[%s1908 + $0x158] sm:$0xf]
    %v1967 = vld [vmem:[%s1908 + $0x15c] sm:$0xff]
    %v1968 = vld [vmem:[%s1908 + $0x164] sm:$0xf]
    %v1969 = vld [vmem:[%s1908 + $0x168] sm:$0xff]
    %v1970 = vld [vmem:[%s1908 + $0x170] sm:$0xf]
    %v1971 = vld [vmem:[%s1908 + $0x174] sm:$0xff]
    %v1972 = vld [vmem:[%s1908 + $0x17c] sm:$0xf]
    %v1973 = vld [vmem:[%s1908 + $0x180] sm:$0xff]
    %v1974 = vld [vmem:[%s1908 + $0x188] sm:$0xf]
    %v1975 = vld [vmem:[%s1908 + $0x18c] sm:$0xff]
    %v1976 = vld [vmem:[%s1908 + $0x194] sm:$0xf]
    %v1977 = vld [vmem:[%s1908 + $0x198] sm:$0xff]
    %v1978 = vld [vmem:[%s1908 + $0x1a0] sm:$0xf]
    %v1979 = vld [vmem:[%s1908 + $0x1a4] sm:$0xff]
    %v1980 = vld [vmem:[%s1908 + $0x1ac] sm:$0xf]
    %v1981 = vld [vmem:[%s1908 + $0x1b0] sm:$0xff]
    %v1982 = vld [vmem:[%s1908 + $0x1b8] sm:$0xf]
    %v1983 = vld [vmem:[%s1908 + $0x1bc] sm:$0xff]
    %v1984 = vld [vmem:[%s1908 + $0x1c4] sm:$0xf]
    %v1985 = vld [vmem:[%s1908 + $0x1c8] sm:$0xff]
    %v1986 = vld [vmem:[%s1908 + $0x1d0] sm:$0xf]
    %v1987 = vld [vmem:[%s1908 + $0x1d4] sm:$0xff]
    %v1988 = vld [vmem:[%s1908 + $0x1dc] sm:$0xf]
    %v1989 = vld [vmem:[%s1908 + $0x1e0] sm:$0xff]
    %v1990 = vld [vmem:[%s1908 + $0x1e8] sm:$0xf]
    %v1991 = vld [vmem:[%s1908 + $0x1ec] sm:$0xff]
    %v1992 = vld [vmem:[%s1908 + $0x1f4] sm:$0xf]
    %v1993 = vld [vmem:[%s1908 + $0x1f8] sm:$0xff]
    %v1994 = vld [vmem:[%s1908 + $0x200] sm:$0xf]
    %v1995 = vld [vmem:[%s1908 + $0x204] sm:$0xff]
    %v1996 = vld [vmem:[%s1908 + $0x20c] sm:$0xf]
    %v1997 = vld [vmem:[%s1908 + $0x210] sm:$0xff]
    %v1998 = vld [vmem:[%s1908 + $0x218] sm:$0xf]
    %v1999 = vld [vmem:[%s1908 + $0x21c] sm:$0xff]
    %v2000 = vld [vmem:[%s1908 + $0x224] sm:$0xf]
    %v2001 = vld [vmem:[%s1908 + $0x228] sm:$0xff]
    %v2002 = vld [vmem:[%s1908 + $0x230] sm:$0xf]
    %v2003 = vld [vmem:[%s1908 + $0x234] sm:$0xff]
    %v2004 = vld [vmem:[%s1908 + $0x23c] sm:$0xf]
    %s2005 = scalar_lea.vmem [#allocation7], 3
    %v2006 = vld [vmem:[%s2005] ss:$8 sm:$0x7]
    %v2008 = vperm.slane %v2006, 0
    %v2009 = vperm.slane %v2006, 1
    %v2010 = vperm.slane %v2006, 2
    %v2110 = vunpack.c.l.b16 %v1909
    %v2111 = vunpack.c.h.b16 %v1909
    %v2112 = vunpack.c.l.b16 %v1910
    %v2113 = vunpack.c.l.b16 %v1911
    %v2114 = vunpack.c.h.b16 %v1911
    %v2115 = vunpack.c.l.b16 %v1912
    %v2116 = vunpack.c.l.b16 %v1913
    %v2117 = vunpack.c.h.b16 %v1913
    %v2118 = vunpack.c.l.b16 %v1914
    %v2119 = vunpack.c.l.b16 %v1915
    %v2120 = vunpack.c.h.b16 %v1915
    %v2121 = vunpack.c.l.b16 %v1916
    %v2122 = vunpack.c.l.b16 %v1917
    %v2123 = vunpack.c.h.b16 %v1917
    %v2124 = vunpack.c.l.b16 %v1918
    %v2125 = vunpack.c.l.b16 %v1919
    %v2126 = vunpack.c.h.b16 %v1919
    %v2127 = vunpack.c.l.b16 %v1920
    %v2128 = vunpack.c.l.b16 %v1921
    %v2129 = vunpack.c.h.b16 %v1921
    %v2130 = vunpack.c.l.b16 %v1922
    %v2131 = vunpack.c.l.b16 %v1923
    %v2132 = vunpack.c.h.b16 %v1923
    %v2133 = vunpack.c.l.b16 %v1924
    %v2134 = vunpack.c.l.b16 %v1925
    %v2135 = vunpack.c.h.b16 %v1925
    %v2136 = vunpack.c.l.b16 %v1926
    %v2137 = vunpack.c.l.b16 %v1927
    %v2138 = vunpack.c.h.b16 %v1927
    %v2139 = vunpack.c.l.b16 %v1928
    %v2140 = vunpack.c.l.b16 %v1929
    %v2141 = vunpack.c.h.b16 %v1929
    %v2142 = vunpack.c.l.b16 %v1930
    %v2143 = vunpack.c.l.b16 %v1931
    %v2144 = vunpack.c.h.b16 %v1931
    %v2145 = vunpack.c.l.b16 %v1932
    %v2146 = vunpack.c.l.b16 %v1933
    %v2147 = vunpack.c.h.b16 %v1933
    %v2148 = vunpack.c.l.b16 %v1934
    %v2149 = vunpack.c.l.b16 %v1935
    %v2150 = vunpack.c.h.b16 %v1935
    %v2151 = vunpack.c.l.b16 %v1936
    %v2152 = vunpack.c.l.b16 %v1937
    %v2153 = vunpack.c.h.b16 %v1937
    %v2154 = vunpack.c.l.b16 %v1938
    %v2155 = vunpack.c.l.b16 %v1939
    %v2156 = vunpack.c.h.b16 %v1939
    %v2157 = vunpack.c.l.b16 %v1940
    %v2158 = vunpack.c.l.b16 %v1941
    %v2159 = vunpack.c.h.b16 %v1941
    %v2160 = vunpack.c.l.b16 %v1942
    %v2161 = vunpack.c.l.b16 %v1943
    %v2162 = vunpack.c.h.b16 %v1943
    %v2163 = vunpack.c.l.b16 %v1944
    %v2164 = vunpack.c.l.b16 %v1945
    %v2165 = vunpack.c.h.b16 %v1945
    %v2166 = vunpack.c.l.b16 %v1946
    %v2167 = vunpack.c.l.b16 %v1947
    %v2168 = vunpack.c.h.b16 %v1947
    %v2169 = vunpack.c.l.b16 %v1948
    %v2170 = vunpack.c.l.b16 %v1949
    %v2171 = vunpack.c.h.b16 %v1949
    %v2172 = vunpack.c.l.b16 %v1950
    %v2173 = vunpack.c.l.b16 %v1951
    %v2174 = vunpack.c.h.b16 %v1951
    %v2175 = vunpack.c.l.b16 %v1952
    %v2176 = vunpack.c.l.b16 %v1953
    %v2177 = vunpack.c.h.b16 %v1953
    %v2178 = vunpack.c.l.b16 %v1954
    %v2179 = vunpack.c.l.b16 %v1955
    %v2180 = vunpack.c.h.b16 %v1955
    %v2181 = vunpack.c.l.b16 %v1956
    %v2182 = vunpack.c.l.b16 %v1957
    %v2183 = vunpack.c.h.b16 %v1957
    %v2184 = vunpack.c.l.b16 %v1958
    %v2185 = vunpack.c.l.b16 %v1959
    %v2186 = vunpack.c.h.b16 %v1959
    %v2187 = vunpack.c.l.b16 %v1960
    %v2188 = vunpack.c.l.b16 %v1961
    %v2189 = vunpack.c.h.b16 %v1961
    %v2190 = vunpack.c.l.b16 %v1962
    %v2191 = vunpack.c.l.b16 %v1963
    %v2192 = vunpack.c.h.b16 %v1963
    %v2193 = vunpack.c.l.b16 %v1964
    %v2194 = vunpack.c.l.b16 %v1965
    %v2195 = vunpack.c.h.b16 %v1965
    %v2196 = vunpack.c.l.b16 %v1966
    %v2197 = vunpack.c.l.b16 %v1967
    %v2198 = vunpack.c.h.b16 %v1967
    %v2199 = vunpack.c.l.b16 %v1968
    %v2200 = vunpack.c.l.b16 %v1969
    %v2201 = vunpack.c.h.b16 %v1969
    %v2202 = vunpack.c.l.b16 %v1970
    %v2203 = vunpack.c.l.b16 %v1971
    %v2204 = vunpack.c.h.b16 %v1971
    %v2205 = vunpack.c.l.b16 %v1972
    %v2206 = vunpack.c.l.b16 %v1973
    %v2207 = vunpack.c.h.b16 %v1973
    %v2208 = vunpack.c.l.b16 %v1974
    %v2209 = vunpack.c.l.b16 %v1975
    %v2210 = vunpack.c.h.b16 %v1975
    %v2211 = vunpack.c.l.b16 %v1976
    %v2212 = vunpack.c.l.b16 %v1977
    %v2213 = vunpack.c.h.b16 %v1977
    %v2214 = vunpack.c.l.b16 %v1978
    %v2215 = vunpack.c.l.b16 %v1979
    %v2216 = vunpack.c.h.b16 %v1979
    %v2217 = vunpack.c.l.b16 %v1980
    %v2218 = vunpack.c.l.b16 %v1981
    %v2219 = vunpack.c.h.b16 %v1981
    %v2220 = vunpack.c.l.b16 %v1982
    %v2221 = vunpack.c.l.b16 %v1983
    %v2222 = vunpack.c.h.b16 %v1983
    %v2223 = vunpack.c.l.b16 %v1984
    %v2224 = vunpack.c.l.b16 %v1985
    %v2225 = vunpack.c.h.b16 %v1985
    %v2226 = vunpack.c.l.b16 %v1986
    %v2227 = vunpack.c.l.b16 %v1987
    %v2228 = vunpack.c.h.b16 %v1987
    %v2229 = vunpack.c.l.b16 %v1988
    %v2230 = vunpack.c.l.b16 %v1989
    %v2231 = vunpack.c.h.b16 %v1989
    %v2232 = vunpack.c.l.b16 %v1990
    %v2233 = vunpack.c.l.b16 %v1991
    %v2234 = vunpack.c.h.b16 %v1991
    %v2235 = vunpack.c.l.b16 %v1992
    %v2236 = vunpack.c.l.b16 %v1993
    %v2237 = vunpack.c.h.b16 %v1993
    %v2238 = vunpack.c.l.b16 %v1994
    %v2239 = vunpack.c.l.b16 %v1995
    %v2240 = vunpack.c.h.b16 %v1995
    %v2241 = vunpack.c.l.b16 %v1996
    %v2242 = vunpack.c.l.b16 %v1997
    %v2243 = vunpack.c.h.b16 %v1997
    %v2244 = vunpack.c.l.b16 %v1998
    %v2245 = vunpack.c.l.b16 %v1999
    %v2246 = vunpack.c.h.b16 %v1999
    %v2247 = vunpack.c.l.b16 %v2000
    %v2248 = vunpack.c.l.b16 %v2001
    %v2249 = vunpack.c.h.b16 %v2001
    %v2250 = vunpack.c.l.b16 %v2002
    %v2251 = vunpack.c.l.b16 %v2003
    %v2252 = vunpack.c.h.b16 %v2003
    %v2253 = vunpack.c.l.b16 %v2004
    %v2254 = vpack.c.b16 %v2113, %v2110
    %v2255 = vpack.c.b16 %v2114, %v2111
    %v2256 = vpack.c.b16 %v2115, %v2112
    %v2257 = vpack.c.b16 %v2119, %v2116
    %v2258 = vpack.c.b16 %v2120, %v2117
    %v2259 = vpack.c.b16 %v2121, %v2118
    %v2260 = vpack.c.b16 %v2125, %v2122
    %v2261 = vpack.c.b16 %v2126, %v2123
    %v2262 = vpack.c.b16 %v2127, %v2124
    %v2263 = vpack.c.b16 %v2131, %v2128
    %v2264 = vpack.c.b16 %v2132, %v2129
    %v2265 = vpack.c.b16 %v2133, %v2130
    %v2266 = vpack.c.b16 %v2137, %v2134
    %v2267 = vpack.c.b16 %v2138, %v2135
    %v2268 = vpack.c.b16 %v2139, %v2136
    %v2269 = vpack.c.b16 %v2143, %v2140
    %v2270 = vpack.c.b16 %v2144, %v2141
    %v2271 = vpack.c.b16 %v2145, %v2142
    %v2272 = vpack.c.b16 %v2149, %v2146
    %v2273 = vpack.c.b16 %v2150, %v2147
    %v2274 = vpack.c.b16 %v2151, %v2148
    %v2275 = vpack.c.b16 %v2155, %v2152
    %v2276 = vpack.c.b16 %v2156, %v2153
    %v2277 = vpack.c.b16 %v2157, %v2154
    %v2278 = vpack.c.b16 %v2161, %v2158
    %v2279 = vpack.c.b16 %v2162, %v2159
    %v2280 = vpack.c.b16 %v2163, %v2160
    %v2281 = vpack.c.b16 %v2167, %v2164
    %v2282 = vpack.c.b16 %v2168, %v2165
    %v2283 = vpack.c.b16 %v2169, %v2166
    %v2284 = vpack.c.b16 %v2173, %v2170
    %v2285 = vpack.c.b16 %v2174, %v2171
    %v2286 = vpack.c.b16 %v2175, %v2172
    %v2287 = vpack.c.b16 %v2179, %v2176
    %v2288 = vpack.c.b16 %v2180, %v2177
    %v2289 = vpack.c.b16 %v2181, %v2178
    %v2290 = vpack.c.b16 %v2185, %v2182
    %v2291 = vpack.c.b16 %v2186, %v2183
    %v2292 = vpack.c.b16 %v2187, %v2184
    %v2293 = vpack.c.b16 %v2191, %v2188
    %v2294 = vpack.c.b16 %v2192, %v2189
    %v2295 = vpack.c.b16 %v2193, %v2190
    %v2296 = vpack.c.b16 %v2197, %v2194
    %v2297 = vpack.c.b16 %v2198, %v2195
    %v2298 = vpack.c.b16 %v2199, %v2196
    %v2299 = vpack.c.b16 %v2203, %v2200
    %v2300 = vpack.c.b16 %v2204, %v2201
    %v2301 = vpack.c.b16 %v2205, %v2202
    %v2302 = vpack.c.b16 %v2209, %v2206
    %v2303 = vpack.c.b16 %v2210, %v2207
    %v2304 = vpack.c.b16 %v2211, %v2208
    %v2305 = vpack.c.b16 %v2215, %v2212
    %v2306 = vpack.c.b16 %v2216, %v2213
    %v2307 = vpack.c.b16 %v2217, %v2214
    %v2308 = vpack.c.b16 %v2221, %v2218
    %v2309 = vpack.c.b16 %v2222, %v2219
    %v2310 = vpack.c.b16 %v2223, %v2220
    %v2311 = vpack.c.b16 %v2227, %v2224
    %v2312 = vpack.c.b16 %v2228, %v2225
    %v2313 = vpack.c.b16 %v2229, %v2226
    %v2314 = vpack.c.b16 %v2233, %v2230
    %v2315 = vpack.c.b16 %v2234, %v2231
    %v2316 = vpack.c.b16 %v2235, %v2232
    %v2317 = vpack.c.b16 %v2239, %v2236
    %v2318 = vpack.c.b16 %v2240, %v2237
    %v2319 = vpack.c.b16 %v2241, %v2238
    %v2320 = vpack.c.b16 %v2245, %v2242
    %v2321 = vpack.c.b16 %v2246, %v2243
    %v2322 = vpack.c.b16 %v2247, %v2244
    %v2323 = vpack.c.b16 %v2251, %v2248
    %v2324 = vpack.c.b16 %v2252, %v2249
    %v2325 = vpack.c.b16 %v2253, %v2250
    %2398 = vmatpush.bf16.msra.mxu0 %v2275
    %2399 = vmatpush.bf16.msra.mxu0 %v2272
    %2400 = vmatpush.bf16.msra.mxu0 %v2269
    %2401 = vmatpush.bf16.msra.mxu0 %v2266
    %2402 = vmatpush.bf16.msra.mxu0 %v2263
    %2403 = vmatpush.bf16.msra.mxu0 %v2260
    %2404 = vmatpush.bf16.msra.mxu0 %v2257
    %2405 = vmatpush.bf16.msra.mxu0 %v2254
    %2406 = vmatmul.bf16.gmra.mxu0 %v1905
    %v2407 = vpop.f32.mrf.mxu0
    %v2408 = vadd.f32 %v2008, %v2407
    %v2409 = vpop.f32.mrf.mxu0
    %2410 = vdwg.mxu0
    %2411 = vmatpush.bf16.msra.mxu0 %v2299
    %2412 = vmatpush.bf16.msra.mxu0 %v2296
    %2413 = vmatpush.bf16.msra.mxu0 %v2293
    %2414 = vmatpush.bf16.msra.mxu0 %v2290
    %2415 = vmatpush.bf16.msra.mxu0 %v2287
    %2416 = vmatpush.bf16.msra.mxu0 %v2284
    %2417 = vmatpush.bf16.msra.mxu0 %v2281
    %2418 = vmatpush.bf16.msra.mxu0 %v2278
    %2419 = vmatmul.bf16.gmra.mxu0 %v1906
    %v2420 = vpop.f32.mrf.mxu0
    %v2421 = vadd.f32 %v2408, %v2420
    %v2422 = vpop.f32.mrf.mxu0
    %2423 = vdwg.mxu0
    %2424 = vmatpush.bf16.msra.mxu0 %v2323
    %2425 = vmatpush.bf16.msra.mxu0 %v2320
    %2426 = vmatpush.bf16.msra.mxu0 %v2317
    %2427 = vmatpush.bf16.msra.mxu0 %v2314
    %2428 = vmatpush.bf16.msra.mxu0 %v2311
    %2429 = vmatpush.bf16.msra.mxu0 %v2308
    %2430 = vmatpush.bf16.msra.mxu0 %v2305
    %2431 = vmatpush.bf16.msra.mxu0 %v2302
    %2432 = vmatmul.bf16.gmra.mxu0 %v1907
    %v2433 = vpop.f32.mrf.mxu0
    %v2434 = vadd.f32 %v2421, %v2433
    %v2435 = vpop.f32.mrf.mxu0
    %2436 = vdwg.mxu0
    %2437 = vmatpush.bf16.msra.mxu0 %v2276
    %2438 = vmatpush.bf16.msra.mxu0 %v2273
    %2439 = vmatpush.bf16.msra.mxu0 %v2270
    %2440 = vmatpush.bf16.msra.mxu0 %v2267
    %2441 = vmatpush.bf16.msra.mxu0 %v2264
    %2442 = vmatpush.bf16.msra.mxu0 %v2261
    %2443 = vmatpush.bf16.msra.mxu0 %v2258
    %2444 = vmatpush.bf16.msra.mxu0 %v2255
    %2445 = vmatmul.bf16.gmra.mxu0 %v1905
    %v2446 = vpop.f32.mrf.mxu0
    %v2447 = vadd.f32 %v2009, %v2446
    %v2448 = vpop.f32.mrf.mxu0
    %2449 = vdwg.mxu0
    %2450 = vmatpush.bf16.msra.mxu0 %v2300
    %2451 = vmatpush.bf16.msra.mxu0 %v2297
    %2452 = vmatpush.bf16.msra.mxu0 %v2294
    %2453 = vmatpush.bf16.msra.mxu0 %v2291
    %2454 = vmatpush.bf16.msra.mxu0 %v2288
    %2455 = vmatpush.bf16.msra.mxu0 %v2285
    %2456 = vmatpush.bf16.msra.mxu0 %v2282
    %2457 = vmatpush.bf16.msra.mxu0 %v2279
    %2458 = vmatmul.bf16.gmra.mxu0 %v1906
    %v2459 = vpop.f32.mrf.mxu0
    %v2460 = vadd.f32 %v2447, %v2459
    %v2461 = vpop.f32.mrf.mxu0
    %2462 = vdwg.mxu0
    %2463 = vmatpush.bf16.msra.mxu0 %v2324
    %2464 = vmatpush.bf16.msra.mxu0 %v2321
    %2465 = vmatpush.bf16.msra.mxu0 %v2318
    %2466 = vmatpush.bf16.msra.mxu0 %v2315
    %2467 = vmatpush.bf16.msra.mxu0 %v2312
    %2468 = vmatpush.bf16.msra.mxu0 %v2309
    %2469 = vmatpush.bf16.msra.mxu0 %v2306
    %2470 = vmatpush.bf16.msra.mxu0 %v2303
    %2471 = vmatmul.bf16.gmra.mxu0 %v1907
    %v2472 = vpop.f32.mrf.mxu0
    %v2473 = vadd.f32 %v2460, %v2472
    %v2474 = vpop.f32.mrf.mxu0
    %2475 = vdwg.mxu0
    %2476 = vmatpush.bf16.msra.mxu0 %v2277
    %2477 = vmatpush.bf16.msra.mxu0 %v2274
    %2478 = vmatpush.bf16.msra.mxu0 %v2271
    %2479 = vmatpush.bf16.msra.mxu0 %v2268
    %2480 = vmatpush.bf16.msra.mxu0 %v2265
    %2481 = vmatpush.bf16.msra.mxu0 %v2262
    %2482 = vmatpush.bf16.msra.mxu0 %v2259
    %2483 = vmatpush.bf16.msra.mxu0 %v2256
    %2484 = vmatmul.bf16.gmra.mxu0 %v1905
    %v2485 = vpop.f32.mrf.mxu0
    %v2486 = vadd.f32 %v2010, %v2485
    %v2487 = vpop.f32.mrf.mxu0
    %2488 = vdwg.mxu0
    %2489 = vmatpush.bf16.msra.mxu0 %v2301
    %2490 = vmatpush.bf16.msra.mxu0 %v2298
    %2491 = vmatpush.bf16.msra.mxu0 %v2295
    %2492 = vmatpush.bf16.msra.mxu0 %v2292
    %2493 = vmatpush.bf16.msra.mxu0 %v2289
    %2494 = vmatpush.bf16.msra.mxu0 %v2286
    %2495 = vmatpush.bf16.msra.mxu0 %v2283
    %2496 = vmatpush.bf16.msra.mxu0 %v2280
    %2497 = vmatmul.bf16.gmra.mxu0 %v1906
    %v2498 = vpop.f32.mrf.mxu0
    %v2499 = vadd.f32 %v2486, %v2498
    %v2500 = vpop.f32.mrf.mxu0
    %2501 = vdwg.mxu0
    %2502 = vmatpush.bf16.msra.mxu0 %v2325
    %2503 = vmatpush.bf16.msra.mxu0 %v2322
    %2504 = vmatpush.bf16.msra.mxu0 %v2319
    %2505 = vmatpush.bf16.msra.mxu0 %v2316
    %2506 = vmatpush.bf16.msra.mxu0 %v2313
    %2507 = vmatpush.bf16.msra.mxu0 %v2310
    %2508 = vmatpush.bf16.msra.mxu0 %v2307
    %2509 = vmatpush.bf16.msra.mxu0 %v2304
    %2510 = vmatmul.bf16.gmra.mxu0 %v1907
    %v2511 = vpop.f32.mrf.mxu0
    %v2512 = vadd.f32 %v2499, %v2511
    %v2513 = vpop.f32.mrf.mxu0
    %2514 = vdwg.mxu0
    %v2515 = vmax.f32 %v2434, 0.0
    %v2516 = vmax.f32 %v2473, 0.0
    %v2517 = vmax.f32 %v2512, 0.0
    %v2518 = vpack.c.bf16 %v2515, %v2515
    %v2519 = vpack.c.bf16 %v2516, %v2516
    %v2520 = vpack.c.bf16 %v2517, %v2517
    %s2521 = scalar_lea.vmem [#allocation5], 2304
    %v2522 = vld [vmem:[%s2521] sm:$0xff]
    %v2523 = vld [vmem:[%s2521 + $0x8] sm:$0xf]
    %v2524 = vld [vmem:[%s2521 + $0xc] sm:$0xff]
    %v2525 = vld [vmem:[%s2521 + $0x14] sm:$0xf]
    %v2526 = vld [vmem:[%s2521 + $0x18] sm:$0xff]
    %v2527 = vld [vmem:[%s2521 + $0x20] sm:$0xf]
    %v2528 = vld [vmem:[%s2521 + $0x24] sm:$0xff]
    %v2529 = vld [vmem:[%s2521 + $0x2c] sm:$0xf]
    %v2530 = vld [vmem:[%s2521 + $0x30] sm:$0xff]
    %v2531 = vld [vmem:[%s2521 + $0x38] sm:$0xf]
    %v2532 = vld [vmem:[%s2521 + $0x3c] sm:$0xff]
    %v2533 = vld [vmem:[%s2521 + $0x44] sm:$0xf]
    %v2534 = vld [vmem:[%s2521 + $0x48] sm:$0xff]
    %v2535 = vld [vmem:[%s2521 + $0x50] sm:$0xf]
    %v2536 = vld [vmem:[%s2521 + $0x54] sm:$0xff]
    %v2537 = vld [vmem:[%s2521 + $0x5c] sm:$0xf]
    %v2538 = vld [vmem:[%s2521 + $0x60] sm:$0xff]
    %v2539 = vld [vmem:[%s2521 + $0x68] sm:$0xf]
    %v2540 = vld [vmem:[%s2521 + $0x6c] sm:$0xff]
    %v2541 = vld [vmem:[%s2521 + $0x74] sm:$0xf]
    %v2542 = vld [vmem:[%s2521 + $0x78] sm:$0xff]
    %v2543 = vld [vmem:[%s2521 + $0x80] sm:$0xf]
    %v2544 = vld [vmem:[%s2521 + $0x84] sm:$0xff]
    %v2545 = vld [vmem:[%s2521 + $0x8c] sm:$0xf]
    %v2546 = vld [vmem:[%s2521 + $0x90] sm:$0xff]
    %v2547 = vld [vmem:[%s2521 + $0x98] sm:$0xf]
    %v2548 = vld [vmem:[%s2521 + $0x9c] sm:$0xff]
    %v2549 = vld [vmem:[%s2521 + $0xa4] sm:$0xf]
    %v2550 = vld [vmem:[%s2521 + $0xa8] sm:$0xff]
    %v2551 = vld [vmem:[%s2521 + $0xb0] sm:$0xf]
    %v2552 = vld [vmem:[%s2521 + $0xb4] sm:$0xff]
    %v2553 = vld [vmem:[%s2521 + $0xbc] sm:$0xf]
    %v2554 = vld [vmem:[%s2521 + $0xc0] sm:$0xff]
    %v2555 = vld [vmem:[%s2521 + $0xc8] sm:$0xf]
    %v2556 = vld [vmem:[%s2521 + $0xcc] sm:$0xff]
    %v2557 = vld [vmem:[%s2521 + $0xd4] sm:$0xf]
    %v2558 = vld [vmem:[%s2521 + $0xd8] sm:$0xff]
    %v2559 = vld [vmem:[%s2521 + $0xe0] sm:$0xf]
    %v2560 = vld [vmem:[%s2521 + $0xe4] sm:$0xff]
    %v2561 = vld [vmem:[%s2521 + $0xec] sm:$0xf]
    %v2562 = vld [vmem:[%s2521 + $0xf0] sm:$0xff]
    %v2563 = vld [vmem:[%s2521 + $0xf8] sm:$0xf]
    %v2564 = vld [vmem:[%s2521 + $0xfc] sm:$0xff]
    %v2565 = vld [vmem:[%s2521 + $0x104] sm:$0xf]
    %v2566 = vld [vmem:[%s2521 + $0x108] sm:$0xff]
    %v2567 = vld [vmem:[%s2521 + $0x110] sm:$0xf]
    %v2568 = vld [vmem:[%s2521 + $0x114] sm:$0xff]
    %v2569 = vld [vmem:[%s2521 + $0x11c] sm:$0xf]
    %v2570 = vld [vmem:[%s2521 + $0x120] sm:$0xff]
    %v2571 = vld [vmem:[%s2521 + $0x128] sm:$0xf]
    %v2572 = vld [vmem:[%s2521 + $0x12c] sm:$0xff]
    %v2573 = vld [vmem:[%s2521 + $0x134] sm:$0xf]
    %v2574 = vld [vmem:[%s2521 + $0x138] sm:$0xff]
    %v2575 = vld [vmem:[%s2521 + $0x140] sm:$0xf]
    %v2576 = vld [vmem:[%s2521 + $0x144] sm:$0xff]
    %v2577 = vld [vmem:[%s2521 + $0x14c] sm:$0xf]
    %v2578 = vld [vmem:[%s2521 + $0x150] sm:$0xff]
    %v2579 = vld [vmem:[%s2521 + $0x158] sm:$0xf]
    %v2580 = vld [vmem:[%s2521 + $0x15c] sm:$0xff]
    %v2581 = vld [vmem:[%s2521 + $0x164] sm:$0xf]
    %v2582 = vld [vmem:[%s2521 + $0x168] sm:$0xff]
    %v2583 = vld [vmem:[%s2521 + $0x170] sm:$0xf]
    %v2584 = vld [vmem:[%s2521 + $0x174] sm:$0xff]
    %v2585 = vld [vmem:[%s2521 + $0x17c] sm:$0xf]
    %v2586 = vld [vmem:[%s2521 + $0x180] sm:$0xff]
    %v2587 = vld [vmem:[%s2521 + $0x188] sm:$0xf]
    %v2588 = vld [vmem:[%s2521 + $0x18c] sm:$0xff]
    %v2589 = vld [vmem:[%s2521 + $0x194] sm:$0xf]
    %v2590 = vld [vmem:[%s2521 + $0x198] sm:$0xff]
    %v2591 = vld [vmem:[%s2521 + $0x1a0] sm:$0xf]
    %v2592 = vld [vmem:[%s2521 + $0x1a4] sm:$0xff]
    %v2593 = vld [vmem:[%s2521 + $0x1ac] sm:$0xf]
    %v2594 = vld [vmem:[%s2521 + $0x1b0] sm:$0xff]
    %v2595 = vld [vmem:[%s2521 + $0x1b8] sm:$0xf]
    %v2596 = vld [vmem:[%s2521 + $0x1bc] sm:$0xff]
    %v2597 = vld [vmem:[%s2521 + $0x1c4] sm:$0xf]
    %v2598 = vld [vmem:[%s2521 + $0x1c8] sm:$0xff]
    %v2599 = vld [vmem:[%s2521 + $0x1d0] sm:$0xf]
    %v2600 = vld [vmem:[%s2521 + $0x1d4] sm:$0xff]
    %v2601 = vld [vmem:[%s2521 + $0x1dc] sm:$0xf]
    %v2602 = vld [vmem:[%s2521 + $0x1e0] sm:$0xff]
    %v2603 = vld [vmem:[%s2521 + $0x1e8] sm:$0xf]
    %v2604 = vld [vmem:[%s2521 + $0x1ec] sm:$0xff]
    %v2605 = vld [vmem:[%s2521 + $0x1f4] sm:$0xf]
    %v2606 = vld [vmem:[%s2521 + $0x1f8] sm:$0xff]
    %v2607 = vld [vmem:[%s2521 + $0x200] sm:$0xf]
    %v2608 = vld [vmem:[%s2521 + $0x204] sm:$0xff]
    %v2609 = vld [vmem:[%s2521 + $0x20c] sm:$0xf]
    %v2610 = vld [vmem:[%s2521 + $0x210] sm:$0xff]
    %v2611 = vld [vmem:[%s2521 + $0x218] sm:$0xf]
    %v2612 = vld [vmem:[%s2521 + $0x21c] sm:$0xff]
    %v2613 = vld [vmem:[%s2521 + $0x224] sm:$0xf]
    %v2614 = vld [vmem:[%s2521 + $0x228] sm:$0xff]
    %v2615 = vld [vmem:[%s2521 + $0x230] sm:$0xf]
    %v2616 = vld [vmem:[%s2521 + $0x234] sm:$0xff]
    %v2617 = vld [vmem:[%s2521 + $0x23c] sm:$0xf]
    %s2618 = scalar_lea.vmem [#allocation7], 4
    %v2619 = vld [vmem:[%s2618] ss:$8 sm:$0x7]
    %v2621 = vperm.slane %v2619, 0
    %v2622 = vperm.slane %v2619, 1
    %v2623 = vperm.slane %v2619, 2
    %v2723 = vunpack.c.l.b16 %v2522
    %v2724 = vunpack.c.h.b16 %v2522
    %v2725 = vunpack.c.l.b16 %v2523
    %v2726 = vunpack.c.l.b16 %v2524
    %v2727 = vunpack.c.h.b16 %v2524
    %v2728 = vunpack.c.l.b16 %v2525
    %v2729 = vunpack.c.l.b16 %v2526
    %v2730 = vunpack.c.h.b16 %v2526
    %v2731 = vunpack.c.l.b16 %v2527
    %v2732 = vunpack.c.l.b16 %v2528
    %v2733 = vunpack.c.h.b16 %v2528
    %v2734 = vunpack.c.l.b16 %v2529
    %v2735 = vunpack.c.l.b16 %v2530
    %v2736 = vunpack.c.h.b16 %v2530
    %v2737 = vunpack.c.l.b16 %v2531
    %v2738 = vunpack.c.l.b16 %v2532
    %v2739 = vunpack.c.h.b16 %v2532
    %v2740 = vunpack.c.l.b16 %v2533
    %v2741 = vunpack.c.l.b16 %v2534
    %v2742 = vunpack.c.h.b16 %v2534
    %v2743 = vunpack.c.l.b16 %v2535
    %v2744 = vunpack.c.l.b16 %v2536
    %v2745 = vunpack.c.h.b16 %v2536
    %v2746 = vunpack.c.l.b16 %v2537
    %v2747 = vunpack.c.l.b16 %v2538
    %v2748 = vunpack.c.h.b16 %v2538
    %v2749 = vunpack.c.l.b16 %v2539
    %v2750 = vunpack.c.l.b16 %v2540
    %v2751 = vunpack.c.h.b16 %v2540
    %v2752 = vunpack.c.l.b16 %v2541
    %v2753 = vunpack.c.l.b16 %v2542
    %v2754 = vunpack.c.h.b16 %v2542
    %v2755 = vunpack.c.l.b16 %v2543
    %v2756 = vunpack.c.l.b16 %v2544
    %v2757 = vunpack.c.h.b16 %v2544
    %v2758 = vunpack.c.l.b16 %v2545
    %v2759 = vunpack.c.l.b16 %v2546
    %v2760 = vunpack.c.h.b16 %v2546
    %v2761 = vunpack.c.l.b16 %v2547
    %v2762 = vunpack.c.l.b16 %v2548
    %v2763 = vunpack.c.h.b16 %v2548
    %v2764 = vunpack.c.l.b16 %v2549
    %v2765 = vunpack.c.l.b16 %v2550
    %v2766 = vunpack.c.h.b16 %v2550
    %v2767 = vunpack.c.l.b16 %v2551
    %v2768 = vunpack.c.l.b16 %v2552
    %v2769 = vunpack.c.h.b16 %v2552
    %v2770 = vunpack.c.l.b16 %v2553
    %v2771 = vunpack.c.l.b16 %v2554
    %v2772 = vunpack.c.h.b16 %v2554
    %v2773 = vunpack.c.l.b16 %v2555
    %v2774 = vunpack.c.l.b16 %v2556
    %v2775 = vunpack.c.h.b16 %v2556
    %v2776 = vunpack.c.l.b16 %v2557
    %v2777 = vunpack.c.l.b16 %v2558
    %v2778 = vunpack.c.h.b16 %v2558
    %v2779 = vunpack.c.l.b16 %v2559
    %v2780 = vunpack.c.l.b16 %v2560
    %v2781 = vunpack.c.h.b16 %v2560
    %v2782 = vunpack.c.l.b16 %v2561
    %v2783 = vunpack.c.l.b16 %v2562
    %v2784 = vunpack.c.h.b16 %v2562
    %v2785 = vunpack.c.l.b16 %v2563
    %v2786 = vunpack.c.l.b16 %v2564
    %v2787 = vunpack.c.h.b16 %v2564
    %v2788 = vunpack.c.l.b16 %v2565
    %v2789 = vunpack.c.l.b16 %v2566
    %v2790 = vunpack.c.h.b16 %v2566
    %v2791 = vunpack.c.l.b16 %v2567
    %v2792 = vunpack.c.l.b16 %v2568
    %v2793 = vunpack.c.h.b16 %v2568
    %v2794 = vunpack.c.l.b16 %v2569
    %v2795 = vunpack.c.l.b16 %v2570
    %v2796 = vunpack.c.h.b16 %v2570
    %v2797 = vunpack.c.l.b16 %v2571
    %v2798 = vunpack.c.l.b16 %v2572
    %v2799 = vunpack.c.h.b16 %v2572
    %v2800 = vunpack.c.l.b16 %v2573
    %v2801 = vunpack.c.l.b16 %v2574
    %v2802 = vunpack.c.h.b16 %v2574
    %v2803 = vunpack.c.l.b16 %v2575
    %v2804 = vunpack.c.l.b16 %v2576
    %v2805 = vunpack.c.h.b16 %v2576
    %v2806 = vunpack.c.l.b16 %v2577
    %v2807 = vunpack.c.l.b16 %v2578
    %v2808 = vunpack.c.h.b16 %v2578
    %v2809 = vunpack.c.l.b16 %v2579
    %v2810 = vunpack.c.l.b16 %v2580
    %v2811 = vunpack.c.h.b16 %v2580
    %v2812 = vunpack.c.l.b16 %v2581
    %v2813 = vunpack.c.l.b16 %v2582
    %v2814 = vunpack.c.h.b16 %v2582
    %v2815 = vunpack.c.l.b16 %v2583
    %v2816 = vunpack.c.l.b16 %v2584
    %v2817 = vunpack.c.h.b16 %v2584
    %v2818 = vunpack.c.l.b16 %v2585
    %v2819 = vunpack.c.l.b16 %v2586
    %v2820 = vunpack.c.h.b16 %v2586
    %v2821 = vunpack.c.l.b16 %v2587
    %v2822 = vunpack.c.l.b16 %v2588
    %v2823 = vunpack.c.h.b16 %v2588
    %v2824 = vunpack.c.l.b16 %v2589
    %v2825 = vunpack.c.l.b16 %v2590
    %v2826 = vunpack.c.h.b16 %v2590
    %v2827 = vunpack.c.l.b16 %v2591
    %v2828 = vunpack.c.l.b16 %v2592
    %v2829 = vunpack.c.h.b16 %v2592
    %v2830 = vunpack.c.l.b16 %v2593
    %v2831 = vunpack.c.l.b16 %v2594
    %v2832 = vunpack.c.h.b16 %v2594
    %v2833 = vunpack.c.l.b16 %v2595
    %v2834 = vunpack.c.l.b16 %v2596
    %v2835 = vunpack.c.h.b16 %v2596
    %v2836 = vunpack.c.l.b16 %v2597
    %v2837 = vunpack.c.l.b16 %v2598
    %v2838 = vunpack.c.h.b16 %v2598
    %v2839 = vunpack.c.l.b16 %v2599
    %v2840 = vunpack.c.l.b16 %v2600
    %v2841 = vunpack.c.h.b16 %v2600
    %v2842 = vunpack.c.l.b16 %v2601
    %v2843 = vunpack.c.l.b16 %v2602
    %v2844 = vunpack.c.h.b16 %v2602
    %v2845 = vunpack.c.l.b16 %v2603
    %v2846 = vunpack.c.l.b16 %v2604
    %v2847 = vunpack.c.h.b16 %v2604
    %v2848 = vunpack.c.l.b16 %v2605
    %v2849 = vunpack.c.l.b16 %v2606
    %v2850 = vunpack.c.h.b16 %v2606
    %v2851 = vunpack.c.l.b16 %v2607
    %v2852 = vunpack.c.l.b16 %v2608
    %v2853 = vunpack.c.h.b16 %v2608
    %v2854 = vunpack.c.l.b16 %v2609
    %v2855 = vunpack.c.l.b16 %v2610
    %v2856 = vunpack.c.h.b16 %v2610
    %v2857 = vunpack.c.l.b16 %v2611
    %v2858 = vunpack.c.l.b16 %v2612
    %v2859 = vunpack.c.h.b16 %v2612
    %v2860 = vunpack.c.l.b16 %v2613
    %v2861 = vunpack.c.l.b16 %v2614
    %v2862 = vunpack.c.h.b16 %v2614
    %v2863 = vunpack.c.l.b16 %v2615
    %v2864 = vunpack.c.l.b16 %v2616
    %v2865 = vunpack.c.h.b16 %v2616
    %v2866 = vunpack.c.l.b16 %v2617
    %v2867 = vpack.c.b16 %v2726, %v2723
    %v2868 = vpack.c.b16 %v2727, %v2724
    %v2869 = vpack.c.b16 %v2728, %v2725
    %v2870 = vpack.c.b16 %v2732, %v2729
    %v2871 = vpack.c.b16 %v2733, %v2730
    %v2872 = vpack.c.b16 %v2734, %v2731
    %v2873 = vpack.c.b16 %v2738, %v2735
    %v2874 = vpack.c.b16 %v2739, %v2736
    %v2875 = vpack.c.b16 %v2740, %v2737
    %v2876 = vpack.c.b16 %v2744, %v2741
    %v2877 = vpack.c.b16 %v2745, %v2742
    %v2878 = vpack.c.b16 %v2746, %v2743
    %v2879 = vpack.c.b16 %v2750, %v2747
    %v2880 = vpack.c.b16 %v2751, %v2748
    %v2881 = vpack.c.b16 %v2752, %v2749
    %v2882 = vpack.c.b16 %v2756, %v2753
    %v2883 = vpack.c.b16 %v2757, %v2754
    %v2884 = vpack.c.b16 %v2758, %v2755
    %v2885 = vpack.c.b16 %v2762, %v2759
    %v2886 = vpack.c.b16 %v2763, %v2760
    %v2887 = vpack.c.b16 %v2764, %v2761
    %v2888 = vpack.c.b16 %v2768, %v2765
    %v2889 = vpack.c.b16 %v2769, %v2766
    %v2890 = vpack.c.b16 %v2770, %v2767
    %v2891 = vpack.c.b16 %v2774, %v2771
    %v2892 = vpack.c.b16 %v2775, %v2772
    %v2893 = vpack.c.b16 %v2776, %v2773
    %v2894 = vpack.c.b16 %v2780, %v2777
    %v2895 = vpack.c.b16 %v2781, %v2778
    %v2896 = vpack.c.b16 %v2782, %v2779
    %v2897 = vpack.c.b16 %v2786, %v2783
    %v2898 = vpack.c.b16 %v2787, %v2784
    %v2899 = vpack.c.b16 %v2788, %v2785
    %v2900 = vpack.c.b16 %v2792, %v2789
    %v2901 = vpack.c.b16 %v2793, %v2790
    %v2902 = vpack.c.b16 %v2794, %v2791
    %v2903 = vpack.c.b16 %v2798, %v2795
    %v2904 = vpack.c.b16 %v2799, %v2796
    %v2905 = vpack.c.b16 %v2800, %v2797
    %v2906 = vpack.c.b16 %v2804, %v2801
    %v2907 = vpack.c.b16 %v2805, %v2802
    %v2908 = vpack.c.b16 %v2806, %v2803
    %v2909 = vpack.c.b16 %v2810, %v2807
    %v2910 = vpack.c.b16 %v2811, %v2808
    %v2911 = vpack.c.b16 %v2812, %v2809
    %v2912 = vpack.c.b16 %v2816, %v2813
    %v2913 = vpack.c.b16 %v2817, %v2814
    %v2914 = vpack.c.b16 %v2818, %v2815
    %v2915 = vpack.c.b16 %v2822, %v2819
    %v2916 = vpack.c.b16 %v2823, %v2820
    %v2917 = vpack.c.b16 %v2824, %v2821
    %v2918 = vpack.c.b16 %v2828, %v2825
    %v2919 = vpack.c.b16 %v2829, %v2826
    %v2920 = vpack.c.b16 %v2830, %v2827
    %v2921 = vpack.c.b16 %v2834, %v2831
    %v2922 = vpack.c.b16 %v2835, %v2832
    %v2923 = vpack.c.b16 %v2836, %v2833
    %v2924 = vpack.c.b16 %v2840, %v2837
    %v2925 = vpack.c.b16 %v2841, %v2838
    %v2926 = vpack.c.b16 %v2842, %v2839
    %v2927 = vpack.c.b16 %v2846, %v2843
    %v2928 = vpack.c.b16 %v2847, %v2844
    %v2929 = vpack.c.b16 %v2848, %v2845
    %v2930 = vpack.c.b16 %v2852, %v2849
    %v2931 = vpack.c.b16 %v2853, %v2850
    %v2932 = vpack.c.b16 %v2854, %v2851
    %v2933 = vpack.c.b16 %v2858, %v2855
    %v2934 = vpack.c.b16 %v2859, %v2856
    %v2935 = vpack.c.b16 %v2860, %v2857
    %v2936 = vpack.c.b16 %v2864, %v2861
    %v2937 = vpack.c.b16 %v2865, %v2862
    %v2938 = vpack.c.b16 %v2866, %v2863
    %3011 = vmatpush.bf16.msra.mxu0 %v2888
    %3012 = vmatpush.bf16.msra.mxu0 %v2885
    %3013 = vmatpush.bf16.msra.mxu0 %v2882
    %3014 = vmatpush.bf16.msra.mxu0 %v2879
    %3015 = vmatpush.bf16.msra.mxu0 %v2876
    %3016 = vmatpush.bf16.msra.mxu0 %v2873
    %3017 = vmatpush.bf16.msra.mxu0 %v2870
    %3018 = vmatpush.bf16.msra.mxu0 %v2867
    %3019 = vmatmul.bf16.gmra.mxu0 %v2518
    %v3020 = vpop.f32.mrf.mxu0
    %v3021 = vadd.f32 %v2621, %v3020
    %v3022 = vpop.f32.mrf.mxu0
    %3023 = vdwg.mxu0
    %3024 = vmatpush.bf16.msra.mxu0 %v2912
    %3025 = vmatpush.bf16.msra.mxu0 %v2909
    %3026 = vmatpush.bf16.msra.mxu0 %v2906
    %3027 = vmatpush.bf16.msra.mxu0 %v2903
    %3028 = vmatpush.bf16.msra.mxu0 %v2900
    %3029 = vmatpush.bf16.msra.mxu0 %v2897
    %3030 = vmatpush.bf16.msra.mxu0 %v2894
    %3031 = vmatpush.bf16.msra.mxu0 %v2891
    %3032 = vmatmul.bf16.gmra.mxu0 %v2519
    %v3033 = vpop.f32.mrf.mxu0
    %v3034 = vadd.f32 %v3021, %v3033
    %v3035 = vpop.f32.mrf.mxu0
    %3036 = vdwg.mxu0
    %3037 = vmatpush.bf16.msra.mxu0 %v2936
    %3038 = vmatpush.bf16.msra.mxu0 %v2933
    %3039 = vmatpush.bf16.msra.mxu0 %v2930
    %3040 = vmatpush.bf16.msra.mxu0 %v2927
    %3041 = vmatpush.bf16.msra.mxu0 %v2924
    %3042 = vmatpush.bf16.msra.mxu0 %v2921
    %3043 = vmatpush.bf16.msra.mxu0 %v2918
    %3044 = vmatpush.bf16.msra.mxu0 %v2915
    %3045 = vmatmul.bf16.gmra.mxu0 %v2520
    %v3046 = vpop.f32.mrf.mxu0
    %v3047 = vadd.f32 %v3034, %v3046
    %v3048 = vpop.f32.mrf.mxu0
    %3049 = vdwg.mxu0
    %3050 = vmatpush.bf16.msra.mxu0 %v2889
    %3051 = vmatpush.bf16.msra.mxu0 %v2886
    %3052 = vmatpush.bf16.msra.mxu0 %v2883
    %3053 = vmatpush.bf16.msra.mxu0 %v2880
    %3054 = vmatpush.bf16.msra.mxu0 %v2877
    %3055 = vmatpush.bf16.msra.mxu0 %v2874
    %3056 = vmatpush.bf16.msra.mxu0 %v2871
    %3057 = vmatpush.bf16.msra.mxu0 %v2868
    %3058 = vmatmul.bf16.gmra.mxu0 %v2518
    %v3059 = vpop.f32.mrf.mxu0
    %v3060 = vadd.f32 %v2622, %v3059
    %v3061 = vpop.f32.mrf.mxu0
    %3062 = vdwg.mxu0
    %3063 = vmatpush.bf16.msra.mxu0 %v2913
    %3064 = vmatpush.bf16.msra.mxu0 %v2910
    %3065 = vmatpush.bf16.msra.mxu0 %v2907
    %3066 = vmatpush.bf16.msra.mxu0 %v2904
    %3067 = vmatpush.bf16.msra.mxu0 %v2901
    %3068 = vmatpush.bf16.msra.mxu0 %v2898
    %3069 = vmatpush.bf16.msra.mxu0 %v2895
    %3070 = vmatpush.bf16.msra.mxu0 %v2892
    %3071 = vmatmul.bf16.gmra.mxu0 %v2519
    %v3072 = vpop.f32.mrf.mxu0
    %v3073 = vadd.f32 %v3060, %v3072
    %v3074 = vpop.f32.mrf.mxu0
    %3075 = vdwg.mxu0
    %3076 = vmatpush.bf16.msra.mxu0 %v2937
    %3077 = vmatpush.bf16.msra.mxu0 %v2934
    %3078 = vmatpush.bf16.msra.mxu0 %v2931
    %3079 = vmatpush.bf16.msra.mxu0 %v2928
    %3080 = vmatpush.bf16.msra.mxu0 %v2925
    %3081 = vmatpush.bf16.msra.mxu0 %v2922
    %3082 = vmatpush.bf16.msra.mxu0 %v2919
    %3083 = vmatpush.bf16.msra.mxu0 %v2916
    %3084 = vmatmul.bf16.gmra.mxu0 %v2520
    %v3085 = vpop.f32.mrf.mxu0
    %v3086 = vadd.f32 %v3073, %v3085
    %v3087 = vpop.f32.mrf.mxu0
    %3088 = vdwg.mxu0
    %3089 = vmatpush.bf16.msra.mxu0 %v2890
    %3090 = vmatpush.bf16.msra.mxu0 %v2887
    %3091 = vmatpush.bf16.msra.mxu0 %v2884
    %3092 = vmatpush.bf16.msra.mxu0 %v2881
    %3093 = vmatpush.bf16.msra.mxu0 %v2878
    %3094 = vmatpush.bf16.msra.mxu0 %v2875
    %3095 = vmatpush.bf16.msra.mxu0 %v2872
    %3096 = vmatpush.bf16.msra.mxu0 %v2869
    %3097 = vmatmul.bf16.gmra.mxu0 %v2518
    %v3098 = vpop.f32.mrf.mxu0
    %v3099 = vadd.f32 %v2623, %v3098
    %v3100 = vpop.f32.mrf.mxu0
    %3101 = vdwg.mxu0
    %3102 = vmatpush.bf16.msra.mxu0 %v2914
    %3103 = vmatpush.bf16.msra.mxu0 %v2911
    %3104 = vmatpush.bf16.msra.mxu0 %v2908
    %3105 = vmatpush.bf16.msra.mxu0 %v2905
    %3106 = vmatpush.bf16.msra.mxu0 %v2902
    %3107 = vmatpush.bf16.msra.mxu0 %v2899
    %3108 = vmatpush.bf16.msra.mxu0 %v2896
    %3109 = vmatpush.bf16.msra.mxu0 %v2893
    %3110 = vmatmul.bf16.gmra.mxu0 %v2519
    %v3111 = vpop.f32.mrf.mxu0
    %v3112 = vadd.f32 %v3099, %v3111
    %v3113 = vpop.f32.mrf.mxu0
    %3114 = vdwg.mxu0
    %3115 = vmatpush.bf16.msra.mxu0 %v2938
    %3116 = vmatpush.bf16.msra.mxu0 %v2935
    %3117 = vmatpush.bf16.msra.mxu0 %v2932
    %3118 = vmatpush.bf16.msra.mxu0 %v2929
    %3119 = vmatpush.bf16.msra.mxu0 %v2926
    %3120 = vmatpush.bf16.msra.mxu0 %v2923
    %3121 = vmatpush.bf16.msra.mxu0 %v2920
    %3122 = vmatpush.bf16.msra.mxu0 %v2917
    %3123 = vmatmul.bf16.gmra.mxu0 %v2520
    %v3124 = vpop.f32.mrf.mxu0
    %v3125 = vadd.f32 %v3112, %v3124
    %v3126 = vpop.f32.mrf.mxu0
    %3127 = vdwg.mxu0
    %v3128 = vmax.f32 %v3047, 0.0
    %v3129 = vmax.f32 %v3086, 0.0
    %v3130 = vmax.f32 %v3125, 0.0
    %v3131 = vpack.c.bf16 %v3128, %v3128
    %v3132 = vpack.c.bf16 %v3129, %v3129
    %v3133 = vpack.c.bf16 %v3130, %v3130
    %s3134 = scalar_lea.vmem [#allocation5], 2880
    %v3135 = vld [vmem:[%s3134] sm:$0xff]
    %v3136 = vld [vmem:[%s3134 + $0x8] sm:$0xf]
    %v3137 = vld [vmem:[%s3134 + $0xc] sm:$0xff]
    %v3138 = vld [vmem:[%s3134 + $0x14] sm:$0xf]
    %v3139 = vld [vmem:[%s3134 + $0x18] sm:$0xff]
    %v3140 = vld [vmem:[%s3134 + $0x20] sm:$0xf]
    %v3141 = vld [vmem:[%s3134 + $0x24] sm:$0xff]
    %v3142 = vld [vmem:[%s3134 + $0x2c] sm:$0xf]
    %v3143 = vld [vmem:[%s3134 + $0x30] sm:$0xff]
    %v3144 = vld [vmem:[%s3134 + $0x38] sm:$0xf]
    %v3145 = vld [vmem:[%s3134 + $0x3c] sm:$0xff]
    %v3146 = vld [vmem:[%s3134 + $0x44] sm:$0xf]
    %v3147 = vld [vmem:[%s3134 + $0x48] sm:$0xff]
    %v3148 = vld [vmem:[%s3134 + $0x50] sm:$0xf]
    %v3149 = vld [vmem:[%s3134 + $0x54] sm:$0xff]
    %v3150 = vld [vmem:[%s3134 + $0x5c] sm:$0xf]
    %v3151 = vld [vmem:[%s3134 + $0x60] sm:$0xff]
    %v3152 = vld [vmem:[%s3134 + $0x68] sm:$0xf]
    %v3153 = vld [vmem:[%s3134 + $0x6c] sm:$0xff]
    %v3154 = vld [vmem:[%s3134 + $0x74] sm:$0xf]
    %v3155 = vld [vmem:[%s3134 + $0x78] sm:$0xff]
    %v3156 = vld [vmem:[%s3134 + $0x80] sm:$0xf]
    %v3157 = vld [vmem:[%s3134 + $0x84] sm:$0xff]
    %v3158 = vld [vmem:[%s3134 + $0x8c] sm:$0xf]
    %v3159 = vld [vmem:[%s3134 + $0x90] sm:$0xff]
    %v3160 = vld [vmem:[%s3134 + $0x98] sm:$0xf]
    %v3161 = vld [vmem:[%s3134 + $0x9c] sm:$0xff]
    %v3162 = vld [vmem:[%s3134 + $0xa4] sm:$0xf]
    %v3163 = vld [vmem:[%s3134 + $0xa8] sm:$0xff]
    %v3164 = vld [vmem:[%s3134 + $0xb0] sm:$0xf]
    %v3165 = vld [vmem:[%s3134 + $0xb4] sm:$0xff]
    %v3166 = vld [vmem:[%s3134 + $0xbc] sm:$0xf]
    %v3167 = vld [vmem:[%s3134 + $0xc0] sm:$0xff]
    %v3168 = vld [vmem:[%s3134 + $0xc8] sm:$0xf]
    %v3169 = vld [vmem:[%s3134 + $0xcc] sm:$0xff]
    %v3170 = vld [vmem:[%s3134 + $0xd4] sm:$0xf]
    %v3171 = vld [vmem:[%s3134 + $0xd8] sm:$0xff]
    %v3172 = vld [vmem:[%s3134 + $0xe0] sm:$0xf]
    %v3173 = vld [vmem:[%s3134 + $0xe4] sm:$0xff]
    %v3174 = vld [vmem:[%s3134 + $0xec] sm:$0xf]
    %v3175 = vld [vmem:[%s3134 + $0xf0] sm:$0xff]
    %v3176 = vld [vmem:[%s3134 + $0xf8] sm:$0xf]
    %v3177 = vld [vmem:[%s3134 + $0xfc] sm:$0xff]
    %v3178 = vld [vmem:[%s3134 + $0x104] sm:$0xf]
    %v3179 = vld [vmem:[%s3134 + $0x108] sm:$0xff]
    %v3180 = vld [vmem:[%s3134 + $0x110] sm:$0xf]
    %v3181 = vld [vmem:[%s3134 + $0x114] sm:$0xff]
    %v3182 = vld [vmem:[%s3134 + $0x11c] sm:$0xf]
    %v3183 = vld [vmem:[%s3134 + $0x120] sm:$0xff]
    %v3184 = vld [vmem:[%s3134 + $0x128] sm:$0xf]
    %v3185 = vld [vmem:[%s3134 + $0x12c] sm:$0xff]
    %v3186 = vld [vmem:[%s3134 + $0x134] sm:$0xf]
    %v3187 = vld [vmem:[%s3134 + $0x138] sm:$0xff]
    %v3188 = vld [vmem:[%s3134 + $0x140] sm:$0xf]
    %v3189 = vld [vmem:[%s3134 + $0x144] sm:$0xff]
    %v3190 = vld [vmem:[%s3134 + $0x14c] sm:$0xf]
    %v3191 = vld [vmem:[%s3134 + $0x150] sm:$0xff]
    %v3192 = vld [vmem:[%s3134 + $0x158] sm:$0xf]
    %v3193 = vld [vmem:[%s3134 + $0x15c] sm:$0xff]
    %v3194 = vld [vmem:[%s3134 + $0x164] sm:$0xf]
    %v3195 = vld [vmem:[%s3134 + $0x168] sm:$0xff]
    %v3196 = vld [vmem:[%s3134 + $0x170] sm:$0xf]
    %v3197 = vld [vmem:[%s3134 + $0x174] sm:$0xff]
    %v3198 = vld [vmem:[%s3134 + $0x17c] sm:$0xf]
    %v3199 = vld [vmem:[%s3134 + $0x180] sm:$0xff]
    %v3200 = vld [vmem:[%s3134 + $0x188] sm:$0xf]
    %v3201 = vld [vmem:[%s3134 + $0x18c] sm:$0xff]
    %v3202 = vld [vmem:[%s3134 + $0x194] sm:$0xf]
    %v3203 = vld [vmem:[%s3134 + $0x198] sm:$0xff]
    %v3204 = vld [vmem:[%s3134 + $0x1a0] sm:$0xf]
    %v3205 = vld [vmem:[%s3134 + $0x1a4] sm:$0xff]
    %v3206 = vld [vmem:[%s3134 + $0x1ac] sm:$0xf]
    %v3207 = vld [vmem:[%s3134 + $0x1b0] sm:$0xff]
    %v3208 = vld [vmem:[%s3134 + $0x1b8] sm:$0xf]
    %v3209 = vld [vmem:[%s3134 + $0x1bc] sm:$0xff]
    %v3210 = vld [vmem:[%s3134 + $0x1c4] sm:$0xf]
    %v3211 = vld [vmem:[%s3134 + $0x1c8] sm:$0xff]
    %v3212 = vld [vmem:[%s3134 + $0x1d0] sm:$0xf]
    %v3213 = vld [vmem:[%s3134 + $0x1d4] sm:$0xff]
    %v3214 = vld [vmem:[%s3134 + $0x1dc] sm:$0xf]
    %v3215 = vld [vmem:[%s3134 + $0x1e0] sm:$0xff]
    %v3216 = vld [vmem:[%s3134 + $0x1e8] sm:$0xf]
    %v3217 = vld [vmem:[%s3134 + $0x1ec] sm:$0xff]
    %v3218 = vld [vmem:[%s3134 + $0x1f4] sm:$0xf]
    %v3219 = vld [vmem:[%s3134 + $0x1f8] sm:$0xff]
    %v3220 = vld [vmem:[%s3134 + $0x200] sm:$0xf]
    %v3221 = vld [vmem:[%s3134 + $0x204] sm:$0xff]
    %v3222 = vld [vmem:[%s3134 + $0x20c] sm:$0xf]
    %v3223 = vld [vmem:[%s3134 + $0x210] sm:$0xff]
    %v3224 = vld [vmem:[%s3134 + $0x218] sm:$0xf]
    %v3225 = vld [vmem:[%s3134 + $0x21c] sm:$0xff]
    %v3226 = vld [vmem:[%s3134 + $0x224] sm:$0xf]
    %v3227 = vld [vmem:[%s3134 + $0x228] sm:$0xff]
    %v3228 = vld [vmem:[%s3134 + $0x230] sm:$0xf]
    %v3229 = vld [vmem:[%s3134 + $0x234] sm:$0xff]
    %v3230 = vld [vmem:[%s3134 + $0x23c] sm:$0xf]
    %s3231 = scalar_lea.vmem [#allocation7], 5
    %v3232 = vld [vmem:[%s3231] ss:$8 sm:$0x7]
    %v3234 = vperm.slane %v3232, 0
    %v3235 = vperm.slane %v3232, 1
    %v3236 = vperm.slane %v3232, 2
    %v3336 = vunpack.c.l.b16 %v3135
    %v3337 = vunpack.c.h.b16 %v3135
    %v3338 = vunpack.c.l.b16 %v3136
    %v3339 = vunpack.c.l.b16 %v3137
    %v3340 = vunpack.c.h.b16 %v3137
    %v3341 = vunpack.c.l.b16 %v3138
    %v3342 = vunpack.c.l.b16 %v3139
    %v3343 = vunpack.c.h.b16 %v3139
    %v3344 = vunpack.c.l.b16 %v3140
    %v3345 = vunpack.c.l.b16 %v3141
    %v3346 = vunpack.c.h.b16 %v3141
    %v3347 = vunpack.c.l.b16 %v3142
    %v3348 = vunpack.c.l.b16 %v3143
    %v3349 = vunpack.c.h.b16 %v3143
    %v3350 = vunpack.c.l.b16 %v3144
    %v3351 = vunpack.c.l.b16 %v3145
    %v3352 = vunpack.c.h.b16 %v3145
    %v3353 = vunpack.c.l.b16 %v3146
    %v3354 = vunpack.c.l.b16 %v3147
    %v3355 = vunpack.c.h.b16 %v3147
    %v3356 = vunpack.c.l.b16 %v3148
    %v3357 = vunpack.c.l.b16 %v3149
    %v3358 = vunpack.c.h.b16 %v3149
    %v3359 = vunpack.c.l.b16 %v3150
    %v3360 = vunpack.c.l.b16 %v3151
    %v3361 = vunpack.c.h.b16 %v3151
    %v3362 = vunpack.c.l.b16 %v3152
    %v3363 = vunpack.c.l.b16 %v3153
    %v3364 = vunpack.c.h.b16 %v3153
    %v3365 = vunpack.c.l.b16 %v3154
    %v3366 = vunpack.c.l.b16 %v3155
    %v3367 = vunpack.c.h.b16 %v3155
    %v3368 = vunpack.c.l.b16 %v3156
    %v3369 = vunpack.c.l.b16 %v3157
    %v3370 = vunpack.c.h.b16 %v3157
    %v3371 = vunpack.c.l.b16 %v3158
    %v3372 = vunpack.c.l.b16 %v3159
    %v3373 = vunpack.c.h.b16 %v3159
    %v3374 = vunpack.c.l.b16 %v3160
    %v3375 = vunpack.c.l.b16 %v3161
    %v3376 = vunpack.c.h.b16 %v3161
    %v3377 = vunpack.c.l.b16 %v3162
    %v3378 = vunpack.c.l.b16 %v3163
    %v3379 = vunpack.c.h.b16 %v3163
    %v3380 = vunpack.c.l.b16 %v3164
    %v3381 = vunpack.c.l.b16 %v3165
    %v3382 = vunpack.c.h.b16 %v3165
    %v3383 = vunpack.c.l.b16 %v3166
    %v3384 = vunpack.c.l.b16 %v3167
    %v3385 = vunpack.c.h.b16 %v3167
    %v3386 = vunpack.c.l.b16 %v3168
    %v3387 = vunpack.c.l.b16 %v3169
    %v3388 = vunpack.c.h.b16 %v3169
    %v3389 = vunpack.c.l.b16 %v3170
    %v3390 = vunpack.c.l.b16 %v3171
    %v3391 = vunpack.c.h.b16 %v3171
    %v3392 = vunpack.c.l.b16 %v3172
    %v3393 = vunpack.c.l.b16 %v3173
    %v3394 = vunpack.c.h.b16 %v3173
    %v3395 = vunpack.c.l.b16 %v3174
    %v3396 = vunpack.c.l.b16 %v3175
    %v3397 = vunpack.c.h.b16 %v3175
    %v3398 = vunpack.c.l.b16 %v3176
    %v3399 = vunpack.c.l.b16 %v3177
    %v3400 = vunpack.c.h.b16 %v3177
    %v3401 = vunpack.c.l.b16 %v3178
    %v3402 = vunpack.c.l.b16 %v3179
    %v3403 = vunpack.c.h.b16 %v3179
    %v3404 = vunpack.c.l.b16 %v3180
    %v3405 = vunpack.c.l.b16 %v3181
    %v3406 = vunpack.c.h.b16 %v3181
    %v3407 = vunpack.c.l.b16 %v3182
    %v3408 = vunpack.c.l.b16 %v3183
    %v3409 = vunpack.c.h.b16 %v3183
    %v3410 = vunpack.c.l.b16 %v3184
    %v3411 = vunpack.c.l.b16 %v3185
    %v3412 = vunpack.c.h.b16 %v3185
    %v3413 = vunpack.c.l.b16 %v3186
    %v3414 = vunpack.c.l.b16 %v3187
    %v3415 = vunpack.c.h.b16 %v3187
    %v3416 = vunpack.c.l.b16 %v3188
    %v3417 = vunpack.c.l.b16 %v3189
    %v3418 = vunpack.c.h.b16 %v3189
    %v3419 = vunpack.c.l.b16 %v3190
    %v3420 = vunpack.c.l.b16 %v3191
    %v3421 = vunpack.c.h.b16 %v3191
    %v3422 = vunpack.c.l.b16 %v3192
    %v3423 = vunpack.c.l.b16 %v3193
    %v3424 = vunpack.c.h.b16 %v3193
    %v3425 = vunpack.c.l.b16 %v3194
    %v3426 = vunpack.c.l.b16 %v3195
    %v3427 = vunpack.c.h.b16 %v3195
    %v3428 = vunpack.c.l.b16 %v3196
    %v3429 = vunpack.c.l.b16 %v3197
    %v3430 = vunpack.c.h.b16 %v3197
    %v3431 = vunpack.c.l.b16 %v3198
    %v3432 = vunpack.c.l.b16 %v3199
    %v3433 = vunpack.c.h.b16 %v3199
    %v3434 = vunpack.c.l.b16 %v3200
    %v3435 = vunpack.c.l.b16 %v3201
    %v3436 = vunpack.c.h.b16 %v3201
    %v3437 = vunpack.c.l.b16 %v3202
    %v3438 = vunpack.c.l.b16 %v3203
    %v3439 = vunpack.c.h.b16 %v3203
    %v3440 = vunpack.c.l.b16 %v3204
    %v3441 = vunpack.c.l.b16 %v3205
    %v3442 = vunpack.c.h.b16 %v3205
    %v3443 = vunpack.c.l.b16 %v3206
    %v3444 = vunpack.c.l.b16 %v3207
    %v3445 = vunpack.c.h.b16 %v3207
    %v3446 = vunpack.c.l.b16 %v3208
    %v3447 = vunpack.c.l.b16 %v3209
    %v3448 = vunpack.c.h.b16 %v3209
    %v3449 = vunpack.c.l.b16 %v3210
    %v3450 = vunpack.c.l.b16 %v3211
    %v3451 = vunpack.c.h.b16 %v3211
    %v3452 = vunpack.c.l.b16 %v3212
    %v3453 = vunpack.c.l.b16 %v3213
    %v3454 = vunpack.c.h.b16 %v3213
    %v3455 = vunpack.c.l.b16 %v3214
    %v3456 = vunpack.c.l.b16 %v3215
    %v3457 = vunpack.c.h.b16 %v3215
    %v3458 = vunpack.c.l.b16 %v3216
    %v3459 = vunpack.c.l.b16 %v3217
    %v3460 = vunpack.c.h.b16 %v3217
    %v3461 = vunpack.c.l.b16 %v3218
    %v3462 = vunpack.c.l.b16 %v3219
    %v3463 = vunpack.c.h.b16 %v3219
    %v3464 = vunpack.c.l.b16 %v3220
    %v3465 = vunpack.c.l.b16 %v3221
    %v3466 = vunpack.c.h.b16 %v3221
    %v3467 = vunpack.c.l.b16 %v3222
    %v3468 = vunpack.c.l.b16 %v3223
    %v3469 = vunpack.c.h.b16 %v3223
    %v3470 = vunpack.c.l.b16 %v3224
    %v3471 = vunpack.c.l.b16 %v3225
    %v3472 = vunpack.c.h.b16 %v3225
    %v3473 = vunpack.c.l.b16 %v3226
    %v3474 = vunpack.c.l.b16 %v3227
    %v3475 = vunpack.c.h.b16 %v3227
    %v3476 = vunpack.c.l.b16 %v3228
    %v3477 = vunpack.c.l.b16 %v3229
    %v3478 = vunpack.c.h.b16 %v3229
    %v3479 = vunpack.c.l.b16 %v3230
    %v3480 = vpack.c.b16 %v3339, %v3336
    %v3481 = vpack.c.b16 %v3340, %v3337
    %v3482 = vpack.c.b16 %v3341, %v3338
    %v3483 = vpack.c.b16 %v3345, %v3342
    %v3484 = vpack.c.b16 %v3346, %v3343
    %v3485 = vpack.c.b16 %v3347, %v3344
    %v3486 = vpack.c.b16 %v3351, %v3348
    %v3487 = vpack.c.b16 %v3352, %v3349
    %v3488 = vpack.c.b16 %v3353, %v3350
    %v3489 = vpack.c.b16 %v3357, %v3354
    %v3490 = vpack.c.b16 %v3358, %v3355
    %v3491 = vpack.c.b16 %v3359, %v3356
    %v3492 = vpack.c.b16 %v3363, %v3360
    %v3493 = vpack.c.b16 %v3364, %v3361
    %v3494 = vpack.c.b16 %v3365, %v3362
    %v3495 = vpack.c.b16 %v3369, %v3366
    %v3496 = vpack.c.b16 %v3370, %v3367
    %v3497 = vpack.c.b16 %v3371, %v3368
    %v3498 = vpack.c.b16 %v3375, %v3372
    %v3499 = vpack.c.b16 %v3376, %v3373
    %v3500 = vpack.c.b16 %v3377, %v3374
    %v3501 = vpack.c.b16 %v3381, %v3378
    %v3502 = vpack.c.b16 %v3382, %v3379
    %v3503 = vpack.c.b16 %v3383, %v3380
    %v3504 = vpack.c.b16 %v3387, %v3384
    %v3505 = vpack.c.b16 %v3388, %v3385
    %v3506 = vpack.c.b16 %v3389, %v3386
    %v3507 = vpack.c.b16 %v3393, %v3390
    %v3508 = vpack.c.b16 %v3394, %v3391
    %v3509 = vpack.c.b16 %v3395, %v3392
    %v3510 = vpack.c.b16 %v3399, %v3396
    %v3511 = vpack.c.b16 %v3400, %v3397
    %v3512 = vpack.c.b16 %v3401, %v3398
    %v3513 = vpack.c.b16 %v3405, %v3402
    %v3514 = vpack.c.b16 %v3406, %v3403
    %v3515 = vpack.c.b16 %v3407, %v3404
    %v3516 = vpack.c.b16 %v3411, %v3408
    %v3517 = vpack.c.b16 %v3412, %v3409
    %v3518 = vpack.c.b16 %v3413, %v3410
    %v3519 = vpack.c.b16 %v3417, %v3414
    %v3520 = vpack.c.b16 %v3418, %v3415
    %v3521 = vpack.c.b16 %v3419, %v3416
    %v3522 = vpack.c.b16 %v3423, %v3420
    %v3523 = vpack.c.b16 %v3424, %v3421
    %v3524 = vpack.c.b16 %v3425, %v3422
    %v3525 = vpack.c.b16 %v3429, %v3426
    %v3526 = vpack.c.b16 %v3430, %v3427
    %v3527 = vpack.c.b16 %v3431, %v3428
    %v3528 = vpack.c.b16 %v3435, %v3432
    %v3529 = vpack.c.b16 %v3436, %v3433
    %v3530 = vpack.c.b16 %v3437, %v3434
    %v3531 = vpack.c.b16 %v3441, %v3438
    %v3532 = vpack.c.b16 %v3442, %v3439
    %v3533 = vpack.c.b16 %v3443, %v3440
    %v3534 = vpack.c.b16 %v3447, %v3444
    %v3535 = vpack.c.b16 %v3448, %v3445
    %v3536 = vpack.c.b16 %v3449, %v3446
    %v3537 = vpack.c.b16 %v3453, %v3450
    %v3538 = vpack.c.b16 %v3454, %v3451
    %v3539 = vpack.c.b16 %v3455, %v3452
    %v3540 = vpack.c.b16 %v3459, %v3456
    %v3541 = vpack.c.b16 %v3460, %v3457
    %v3542 = vpack.c.b16 %v3461, %v3458
    %v3543 = vpack.c.b16 %v3465, %v3462
    %v3544 = vpack.c.b16 %v3466, %v3463
    %v3545 = vpack.c.b16 %v3467, %v3464
    %v3546 = vpack.c.b16 %v3471, %v3468
    %v3547 = vpack.c.b16 %v3472, %v3469
    %v3548 = vpack.c.b16 %v3473, %v3470
    %v3549 = vpack.c.b16 %v3477, %v3474
    %v3550 = vpack.c.b16 %v3478, %v3475
    %v3551 = vpack.c.b16 %v3479, %v3476
    %3624 = vmatpush.bf16.msra.mxu0 %v3501
    %3625 = vmatpush.bf16.msra.mxu0 %v3498
    %3626 = vmatpush.bf16.msra.mxu0 %v3495
    %3627 = vmatpush.bf16.msra.mxu0 %v3492
    %3628 = vmatpush.bf16.msra.mxu0 %v3489
    %3629 = vmatpush.bf16.msra.mxu0 %v3486
    %3630 = vmatpush.bf16.msra.mxu0 %v3483
    %3631 = vmatpush.bf16.msra.mxu0 %v3480
    %3632 = vmatmul.bf16.gmra.mxu0 %v3131
    %v3633 = vpop.f32.mrf.mxu0
    %v3634 = vadd.f32 %v3234, %v3633
    %v3635 = vpop.f32.mrf.mxu0
    %3636 = vdwg.mxu0
    %3637 = vmatpush.bf16.msra.mxu0 %v3525
    %3638 = vmatpush.bf16.msra.mxu0 %v3522
    %3639 = vmatpush.bf16.msra.mxu0 %v3519
    %3640 = vmatpush.bf16.msra.mxu0 %v3516
    %3641 = vmatpush.bf16.msra.mxu0 %v3513
    %3642 = vmatpush.bf16.msra.mxu0 %v3510
    %3643 = vmatpush.bf16.msra.mxu0 %v3507
    %3644 = vmatpush.bf16.msra.mxu0 %v3504
    %3645 = vmatmul.bf16.gmra.mxu0 %v3132
    %v3646 = vpop.f32.mrf.mxu0
    %v3647 = vadd.f32 %v3634, %v3646
    %v3648 = vpop.f32.mrf.mxu0
    %3649 = vdwg.mxu0
    %3650 = vmatpush.bf16.msra.mxu0 %v3549
    %3651 = vmatpush.bf16.msra.mxu0 %v3546
    %3652 = vmatpush.bf16.msra.mxu0 %v3543
    %3653 = vmatpush.bf16.msra.mxu0 %v3540
    %3654 = vmatpush.bf16.msra.mxu0 %v3537
    %3655 = vmatpush.bf16.msra.mxu0 %v3534
    %3656 = vmatpush.bf16.msra.mxu0 %v3531
    %3657 = vmatpush.bf16.msra.mxu0 %v3528
    %3658 = vmatmul.bf16.gmra.mxu0 %v3133
    %v3659 = vpop.f32.mrf.mxu0
    %v3660 = vadd.f32 %v3647, %v3659
    %v3661 = vpop.f32.mrf.mxu0
    %3662 = vdwg.mxu0
    %3663 = vmatpush.bf16.msra.mxu0 %v3502
    %3664 = vmatpush.bf16.msra.mxu0 %v3499
    %3665 = vmatpush.bf16.msra.mxu0 %v3496
    %3666 = vmatpush.bf16.msra.mxu0 %v3493
    %3667 = vmatpush.bf16.msra.mxu0 %v3490
    %3668 = vmatpush.bf16.msra.mxu0 %v3487
    %3669 = vmatpush.bf16.msra.mxu0 %v3484
    %3670 = vmatpush.bf16.msra.mxu0 %v3481
    %3671 = vmatmul.bf16.gmra.mxu0 %v3131
    %v3672 = vpop.f32.mrf.mxu0
    %v3673 = vadd.f32 %v3235, %v3672
    %v3674 = vpop.f32.mrf.mxu0
    %3675 = vdwg.mxu0
    %3676 = vmatpush.bf16.msra.mxu0 %v3526
    %3677 = vmatpush.bf16.msra.mxu0 %v3523
    %3678 = vmatpush.bf16.msra.mxu0 %v3520
    %3679 = vmatpush.bf16.msra.mxu0 %v3517
    %3680 = vmatpush.bf16.msra.mxu0 %v3514
    %3681 = vmatpush.bf16.msra.mxu0 %v3511
    %3682 = vmatpush.bf16.msra.mxu0 %v3508
    %3683 = vmatpush.bf16.msra.mxu0 %v3505
    %3684 = vmatmul.bf16.gmra.mxu0 %v3132
    %v3685 = vpop.f32.mrf.mxu0
    %v3686 = vadd.f32 %v3673, %v3685
    %v3687 = vpop.f32.mrf.mxu0
    %3688 = vdwg.mxu0
    %3689 = vmatpush.bf16.msra.mxu0 %v3550
    %3690 = vmatpush.bf16.msra.mxu0 %v3547
    %3691 = vmatpush.bf16.msra.mxu0 %v3544
    %3692 = vmatpush.bf16.msra.mxu0 %v3541
    %3693 = vmatpush.bf16.msra.mxu0 %v3538
    %3694 = vmatpush.bf16.msra.mxu0 %v3535
    %3695 = vmatpush.bf16.msra.mxu0 %v3532
    %3696 = vmatpush.bf16.msra.mxu0 %v3529
    %3697 = vmatmul.bf16.gmra.mxu0 %v3133
    %v3698 = vpop.f32.mrf.mxu0
    %v3699 = vadd.f32 %v3686, %v3698
    %v3700 = vpop.f32.mrf.mxu0
    %3701 = vdwg.mxu0
    %3702 = vmatpush.bf16.msra.mxu0 %v3503
    %3703 = vmatpush.bf16.msra.mxu0 %v3500
    %3704 = vmatpush.bf16.msra.mxu0 %v3497
    %3705 = vmatpush.bf16.msra.mxu0 %v3494
    %3706 = vmatpush.bf16.msra.mxu0 %v3491
    %3707 = vmatpush.bf16.msra.mxu0 %v3488
    %3708 = vmatpush.bf16.msra.mxu0 %v3485
    %3709 = vmatpush.bf16.msra.mxu0 %v3482
    %3710 = vmatmul.bf16.gmra.mxu0 %v3131
    %v3711 = vpop.f32.mrf.mxu0
    %v3712 = vadd.f32 %v3236, %v3711
    %v3713 = vpop.f32.mrf.mxu0
    %3714 = vdwg.mxu0
    %3715 = vmatpush.bf16.msra.mxu0 %v3527
    %3716 = vmatpush.bf16.msra.mxu0 %v3524
    %3717 = vmatpush.bf16.msra.mxu0 %v3521
    %3718 = vmatpush.bf16.msra.mxu0 %v3518
    %3719 = vmatpush.bf16.msra.mxu0 %v3515
    %3720 = vmatpush.bf16.msra.mxu0 %v3512
    %3721 = vmatpush.bf16.msra.mxu0 %v3509
    %3722 = vmatpush.bf16.msra.mxu0 %v3506
    %3723 = vmatmul.bf16.gmra.mxu0 %v3132
    %v3724 = vpop.f32.mrf.mxu0
    %v3725 = vadd.f32 %v3712, %v3724
    %v3726 = vpop.f32.mrf.mxu0
    %3727 = vdwg.mxu0
    %3728 = vmatpush.bf16.msra.mxu0 %v3551
    %3729 = vmatpush.bf16.msra.mxu0 %v3548
    %3730 = vmatpush.bf16.msra.mxu0 %v3545
    %3731 = vmatpush.bf16.msra.mxu0 %v3542
    %3732 = vmatpush.bf16.msra.mxu0 %v3539
    %3733 = vmatpush.bf16.msra.mxu0 %v3536
    %3734 = vmatpush.bf16.msra.mxu0 %v3533
    %3735 = vmatpush.bf16.msra.mxu0 %v3530
    %3736 = vmatmul.bf16.gmra.mxu0 %v3133
    %v3737 = vpop.f32.mrf.mxu0
    %v3738 = vadd.f32 %v3725, %v3737
    %v3739 = vpop.f32.mrf.mxu0
    %3740 = vdwg.mxu0
    %v3741 = vmax.f32 %v3660, 0.0
    %v3742 = vmax.f32 %v3699, 0.0
    %v3743 = vmax.f32 %v3738, 0.0
    %v3744 = vpack.c.bf16 %v3742, %v3741
    %v3745 = vpack.c.bf16 %v3743, %v3743
    %3746 = vst [vmem:[#allocation8] sm:$0xff] %v3744
    %3747 = vst [vmem:[#allocation8 + $0x8] sm:$0xf] %v3745
    // Predicated region
    $region26: #{tpu_custom_call.1} parent=1 // pred_check
      _
    $region27: #{tpu_custom_call.1} parent=1 // pred_check_branch
      %3749 = sbr.rel (0) target = $region29
    $region28: #{tpu_custom_call.1} parent=1 // pred_region
      %3751 = vsyncadd [#allocation4], 0
      %s3753 = sshll.u32 [#allocation8], 4
      %s3754 = int_to_ptr.vmem [resolvable:$true] %s3753
      %s3755 = sshll.u32 %s3, 4
      %s3756 = int_to_ptr.hbm [resolvable:$true] %s3755
      %3758 = dma.vmem_to_hbm [thread:$0]  %s3754, 192, %s3756, [#allocation4]
    $region29: #{tpu_custom_call.1} parent=1 // pred_fallthru
      _
    // Predicated region
    $region30: #{tpu_custom_call.1} parent=1 // pred_check
      _
    $region31: #{tpu_custom_call.1} parent=1 // pred_check_branch
      %3760 = sbr.rel (0) target = $region33
    $region32: #{tpu_custom_call.1} parent=1 // pred_region
      %3762 = dma.done [#allocation4], 192
    $region33: #{tpu_custom_call.1} parent=1 // pred_fallthru
      _
    %3763 = vsyncpa [#allocation3], 1
    %3764 = vsyncpa [#allocation6], 1
    %3765 = vsyncpa [#allocation4], 1

</llo_original>
